<compile_context>
chip_gen: v7x
topology: tpu7x:2x2x1
jax: 0.10.0
libtpu: 0.0.40
codegen_flags: <defaults>
</compile_context>

<pallas_src>
import functools

import jax
import jax.numpy as jnp
from jax.experimental import pallas as pl
from jax.experimental.pallas import tpu as pltpu


# ---------------------------------------------------------------------------
# Helpers
# ---------------------------------------------------------------------------
def _round_up(x, m):
    return ((x + m - 1) // m) * m


def _im2col(x_nhwc):
    """3x3, stride 1, pad 1 patches: (N,H,W,C) -> (N*H*W, 9*C), order (kh,kw,c)."""
    N, H, W, C = x_nhwc.shape
    xp = jnp.pad(x_nhwc, ((0, 0), (1, 1), (1, 1), (0, 0)))
    patches = [xp[:, dh:dh + H, dw:dw + W, :] for dh in range(3) for dw in range(3)]
    return jnp.stack(patches, axis=3).reshape(N * H * W, 9 * C)


def _pick_tile_m(K, Coutp, vmem_budget_bytes=8 << 20, tile_m_max=1024):
    """Largest row-tile (multiple of 16) whose double-buffered working set fits
    a conservative VMEM budget (safe on v7x's 64 MiB VMEM)."""
    # per row: 2 bf16 patch tiles in + 2 f32 feature tiles out.
    per_row_bytes = 2 * (K * 2) + 2 * (Coutp * 4)
    tm = vmem_budget_bytes // (2 * per_row_bytes)       # x2 for double buffering
    tm = max(16, min(tile_m_max, (tm // 16) * 16))
    return int(tm)


# ---------------------------------------------------------------------------
# Pallas kernel (hot path): fused dual conv3x3+ReLU + partial L1
# ---------------------------------------------------------------------------
def _fused_conv_l1_kernel(pi_ref, pt_ref, w_ref, b_ref, fi_ref, ft_ref, part_ref):
    # pi_ref/pt_ref: (tm, K) bf16 im2col patches (input / target paths)
    # w_ref:         (K, Coutp) bf16, resident across the M grid
    # b_ref:         (1, Coutp) f32
    # fi_ref/ft_ref: (tm, Coutp) f32 conv+ReLU outputs
    # part_ref:      (8, Coutp) f32 per-tile partial |diff| sums (row 0 holds data)
    zi = jnp.dot(pi_ref[...], w_ref[...], preferred_element_type=jnp.float32)
    zt = jnp.dot(pt_ref[...], w_ref[...], preferred_element_type=jnp.float32)
    fi = jnp.maximum(zi + b_ref[...], 0.0)
    ft = jnp.maximum(zt + b_ref[...], 0.0)
    fi_ref[...] = fi.astype(fi_ref.dtype)
    ft_ref[...] = ft.astype(ft_ref.dtype)

    # Partial L1: column sums of |fi - ft| for this tile, written lane-dense
    # into row 0 of an (8, Coutp) block (independent per grid step -> safe to
    # run the M axis "parallel"; final tiny sum happens in JAX).
    col = jnp.sum(jnp.abs(fi - ft), axis=0, keepdims=True)          # (1, Coutp)
    rows = jax.lax.broadcasted_iota(jnp.int32, part_ref.shape, 0)   # (8, Coutp)
    part_ref[...] = jnp.where(rows == 0, col, 0.0)


# ---------------------------------------------------------------------------
# Wrapper: one fused layer = conv3x3+ReLU on both paths + L1 term
# ---------------------------------------------------------------------------
def conv3x3_relu_pair_l1(x_in, x_tg, w_hwio, b, *, tile_m=None):
    """Returns (feat_in, feat_tg, l1_mean) for one conv3x3(pad=1)+ReLU layer."""
    N, H, W, Cin = x_in.shape
    Cout = w_hwio.shape[-1]
    K = 9 * Cin
    Coutp = _round_up(Cout, 128)          # lane-dense output / MXU N dim
    M = N * H * W

    # im2col in bf16 (halves patch-slab HBM bytes; MXU accumulates in f32).
    p_in = _im2col(x_in).astype(jnp.bfloat16)
    p_tg = _im2col(x_tg).astype(jnp.bfloat16)

    if tile_m is None:
        tile_m = _pick_tile_m(K, Coutp)
    tile_m = max(16, (min(int(tile_m), _round_up(M, 16)) // 16) * 16)
    Mp = _round_up(M, tile_m)
    if Mp != M:
        # Identical zero padding on both paths -> padded rows contribute 0 to L1.
        p_in = jnp.pad(p_in, ((0, Mp - M), (0, 0)))
        p_tg = jnp.pad(p_tg, ((0, Mp - M), (0, 0)))
    grid_m = Mp // tile_m

    wmat = jnp.pad(w_hwio.reshape(K, Cout), ((0, 0), (0, Coutp - Cout))).astype(jnp.bfloat16)
    bmat = jnp.pad(b.astype(jnp.float32).reshape(1, Cout), ((0, 0), (0, Coutp - Cout)))

    f_in, f_tg, parts = pl.pallas_call(
        _fused_conv_l1_kernel,
        out_shape=(
            jax.ShapeDtypeStruct((Mp, Coutp), jnp.float32),
            jax.ShapeDtypeStruct((Mp, Coutp), jnp.float32),
            jax.ShapeDtypeStruct((grid_m * 8, Coutp), jnp.float32),
        ),
        grid=(grid_m,),
        in_specs=[
            pl.BlockSpec((tile_m, K), lambda i: (i, 0)),
            pl.BlockSpec((tile_m, K), lambda i: (i, 0)),
            pl.BlockSpec((K, Coutp), lambda i: (0, 0)),      # resident weights
            pl.BlockSpec((1, Coutp), lambda i: (0, 0)),      # resident bias
        ],
        out_specs=(
            pl.BlockSpec((tile_m, Coutp), lambda i: (i, 0)),
            pl.BlockSpec((tile_m, Coutp), lambda i: (i, 0)),
            pl.BlockSpec((8, Coutp), lambda i: (i, 0)),
        ),
        compiler_params=pltpu.CompilerParams(
            dimension_semantics=("parallel",),               # v7x: shard M tiles on 2 TCs
            vmem_limit_bytes=32 * 1024 * 1024,
        ),
    )(p_in, p_tg, wmat, bmat)

    feat_in = f_in[:M, :Cout].reshape(N, H, W, Cout)
    feat_tg = f_tg[:M, :Cout].reshape(N, H, W, Cout)
    l1 = jnp.sum(parts) / jnp.float32(M * Cout)              # nn.L1Loss (mean)
    return feat_in, feat_tg, l1


def perceptual_loss(input_nchw, target_nchw, params, layer_weights, tile_m=None):
    """forward(input, target): sum_i w_i * L1(feat_i(input), feat_i(target))."""
    hi = jnp.transpose(input_nchw, (0, 2, 3, 1))   # NCHW -> NHWC
    ht = jnp.transpose(target_nchw, (0, 2, 3, 1))
    loss = jnp.float32(0.0)
    for lw, (w, b) in zip(layer_weights, params):
        hi, ht, l1 = conv3x3_relu_pair_l1(hi, ht, w, b, tile_m=tile_m)
        loss = loss + jnp.float32(lw) * l1
    return loss


# ---------------------------------------------------------------------------
# Pure-JAX reference (same math path: bf16 matmul operands, f32 accumulation)
# ---------------------------------------------------------------------------
def _ref_conv3x3_relu(x, w, b):
    N, H, W, Cin = x.shape
    Cout = w.shape[-1]
    p = _im2col(x).astype(jnp.bfloat16)
    wm = w.reshape(9 * Cin, Cout).astype(jnp.bfloat16)
    z = jnp.dot(p, wm, preferred_element_type=jnp.float32) + b.astype(jnp.float32)[None, :]
    return jnp.maximum(z, 0.0).reshape(N, H, W, Cout)


def _ref_loss(input_nchw, target_nchw, params, layer_weights):
    hi = jnp.transpose(input_nchw, (0, 2, 3, 1))
    ht = jnp.transpose(target_nchw, (0, 2, 3, 1))
    loss = jnp.float32(0.0)
    for lw, (w, b) in zip(layer_weights, params):
        hi = _ref_conv3x3_relu(hi, w, b)
        ht = _ref_conv3x3_relu(ht, w, b)
        loss = loss + jnp.float32(lw) * jnp.mean(jnp.abs(hi - ht))
    return loss


# ---------------------------------------------------------------------------
# Main
# ---------------------------------------------------------------------------
if __name__ == "__main__":
    key = jax.random.PRNGKey(0)

    # Small synthetic shapes: batch=2, channels=4, spatial=16x16 (NCHW like PyTorch).
    N, C, H, W = 2, 4, 16, 16
    key, k_in, k_tg = jax.random.split(key, 3)
    x_input = jax.random.normal(k_in, (N, C, H, W), dtype=jnp.float32)
    x_target = jax.random.normal(k_tg, (N, C, H, W), dtype=jnp.float32)

    # Deterministic synthetic "VGG" parameters: 3 conv3x3+ReLU layers.
    channels = [C, 8, 16, 16]
    params = []
    for li in range(len(channels) - 1):
        cin, cout = channels[li], channels[li + 1]
        key, kw, kb = jax.random.split(key, 3)
        fan_in = 9 * cin
        w = jax.random.normal(kw, (3, 3, cin, cout), dtype=jnp.float32) * (2.0 / fan_in) ** 0.5
        b = 0.01 * jax.random.normal(kb, (cout,), dtype=jnp.float32)
        params.append((w, b))

    layer_weights = [1.0, 0.75, 0.5]

    # tile_m=128 -> 4 grid steps per layer at these toy shapes (exercises the
    # tiled / pipelined path); pass tile_m=None to auto-size for real shapes.
    loss_fn = jax.jit(functools.partial(perceptual_loss,
                                        params=params,
                                        layer_weights=layer_weights,
                                        tile_m=128))
    loss = loss_fn(x_input, x_target)
    jax.block_until_ready(loss)

    # Sanity check against a pure-JAX reference following the same math path.
    ref = _ref_loss(x_input, x_target, params, layer_weights)
    jax.block_until_ready(ref)
    if not bool(jnp.abs(loss - ref) < 1e-2 * jnp.maximum(1.0, jnp.abs(ref))):
        raise AssertionError(f"mismatch: pallas={float(loss)} ref={float(ref)}")

    print("KERNEL_OK")
</pallas_src>

<mosaic_0001>
module attributes {stable_mosaic.version = 11 : i64} {
  func.func @_fused_conv_l1_kernel(%arg0: i32, %arg1: memref<128x36xbf16, #tpu.memory_space<vmem>>, %arg2: memref<128x36xbf16, #tpu.memory_space<vmem>>, %arg3: memref<36x128xbf16, #tpu.memory_space<vmem>>, %arg4: memref<1x128xf32, #tpu.memory_space<vmem>>, %arg5: memref<128x128xf32, #tpu.memory_space<vmem>>, %arg6: memref<128x128xf32, #tpu.memory_space<vmem>>, %arg7: memref<8x128xf32, #tpu.memory_space<vmem>>) attributes {dimension_semantics = [#tpu.dimension_semantics<parallel>], iteration_bounds = array<i64: 4>, scalar_prefetch = 0 : i64, scratch_operands = 0 : i64, tpu.core_type = #tpu.core_type<tc>, window_params = [{transform_indices = @transform_0, window_bounds = array<i64: 128, 36>}, {transform_indices = @transform_1, window_bounds = array<i64: 128, 36>}, {pipeline_mode = #tpu.pipeline_mode<synchronous>, transform_indices = @transform_2, window_bounds = array<i64: 36, 128>}, {pipeline_mode = #tpu.pipeline_mode<synchronous>, transform_indices = @transform_3, window_bounds = array<i64: 1, 128>}, {transform_indices = @transform_4, window_bounds = array<i64: 128, 128>}, {transform_indices = @transform_5, window_bounds = array<i64: 128, 128>}, {transform_indices = @transform_6, window_bounds = array<i64: 8, 128>}]} {
    %c0 = arith.constant 0 : index
    %c0_0 = arith.constant 0 : index
    %0 = vector.load %arg1[%c0, %c0_0] : memref<128x36xbf16, #tpu.memory_space<vmem>>, vector<128x36xbf16>
    %c0_1 = arith.constant 0 : index
    %c0_2 = arith.constant 0 : index
    %1 = vector.load %arg3[%c0_1, %c0_2] : memref<36x128xbf16, #tpu.memory_space<vmem>>, vector<36x128xbf16>
    %cst = arith.constant dense<0.000000e+00> : vector<128x128xf32>
    %2 = tpu.matmul %0, %1, %cst {dimension_numbers = #tpu.dot_dimension_numbers<[1], [0], [0], [1], [0, 0, 1, 1], [], []>} : vector<128x36xbf16>, vector<36x128xbf16>, vector<128x128xf32> -> vector<128x128xf32>
    %c0_3 = arith.constant 0 : index
    %c0_4 = arith.constant 0 : index
    %3 = vector.load %arg2[%c0_3, %c0_4] : memref<128x36xbf16, #tpu.memory_space<vmem>>, vector<128x36xbf16>
    %c0_5 = arith.constant 0 : index
    %c0_6 = arith.constant 0 : index
    %4 = vector.load %arg3[%c0_5, %c0_6] : memref<36x128xbf16, #tpu.memory_space<vmem>>, vector<36x128xbf16>
    %cst_7 = arith.constant dense<0.000000e+00> : vector<128x128xf32>
    %5 = tpu.matmul %3, %4, %cst_7 {dimension_numbers = #tpu.dot_dimension_numbers<[1], [0], [0], [1], [0, 0, 1, 1], [], []>} : vector<128x36xbf16>, vector<36x128xbf16>, vector<128x128xf32> -> vector<128x128xf32>
    %c0_8 = arith.constant 0 : index
    %c0_9 = arith.constant 0 : index
    %6 = vector.load %arg4[%c0_8, %c0_9] : memref<1x128xf32, #tpu.memory_space<vmem>>, vector<1x128xf32>
    %7 = vector.broadcast %6 : vector<1x128xf32> to vector<128x128xf32>
    %8 = arith.addf %2, %7 : vector<128x128xf32>
    %cst_10 = arith.constant 0.000000e+00 : f32
    %9 = vector.broadcast %cst_10 : f32 to vector<128x128xf32>
    %10 = arith.maximumf %8, %9 : vector<128x128xf32>
    %c0_11 = arith.constant 0 : index
    %c0_12 = arith.constant 0 : index
    %11 = vector.load %arg4[%c0_11, %c0_12] : memref<1x128xf32, #tpu.memory_space<vmem>>, vector<1x128xf32>
    %12 = vector.broadcast %11 : vector<1x128xf32> to vector<128x128xf32>
    %13 = arith.addf %5, %12 : vector<128x128xf32>
    %cst_13 = arith.constant 0.000000e+00 : f32
    %14 = vector.broadcast %cst_13 : f32 to vector<128x128xf32>
    %15 = arith.maximumf %13, %14 : vector<128x128xf32>
    %c0_14 = arith.constant 0 : index
    %c0_15 = arith.constant 0 : index
    %16 = vector.load %arg5[%c0_14, %c0_15] : memref<128x128xf32, #tpu.memory_space<vmem>>, vector<128x128xf32>
    tpu.vector_store %arg5[%c0_14, %c0_15], %10 {strides = array<i32>} : memref<128x128xf32, #tpu.memory_space<vmem>>, vector<128x128xf32>,
    %c0_16 = arith.constant 0 : index
    %c0_17 = arith.constant 0 : index
    %17 = vector.load %arg6[%c0_16, %c0_17] : memref<128x128xf32, #tpu.memory_space<vmem>>, vector<128x128xf32>
    tpu.vector_store %arg6[%c0_16, %c0_17], %15 {strides = array<i32>} : memref<128x128xf32, #tpu.memory_space<vmem>>, vector<128x128xf32>,
    %18 = arith.subf %10, %15 : vector<128x128xf32>
    %19 = math.absf %18 : vector<128x128xf32>
    %cst_18 = arith.constant dense<0.000000e+00> : vector<128xf32>
    %20 = vector.multi_reduction <add>, %19, %cst_18 [0] : vector<128x128xf32> to vector<128xf32>
    %21 = vector.shape_cast %20 : vector<128xf32> to vector<1x128xf32>
    %22 = tpu.iota {dimensions = array<i32: 0>} : vector<8x128xi32>
    %c0_i32 = arith.constant 0 : i32
    %23 = vector.broadcast %c0_i32 : i32 to vector<8x128xi32>
    %24 = arith.cmpi eq, %22, %23 : vector<8x128xi32>
    %cst_19 = arith.constant 0.000000e+00 : f32
    %25 = vector.shape_cast %21 : vector<1x128xf32> to vector<1x128xf32>
    %26 = vector.broadcast %25 : vector<1x128xf32> to vector<8x128xf32>
    %27 = vector.broadcast %cst_19 : f32 to vector<8x128xf32>
    %28 = arith.select %24, %26, %27 : vector<8x128xi1>, vector<8x128xf32>
    %c0_20 = arith.constant 0 : index
    %c0_21 = arith.constant 0 : index
    %29 = vector.load %arg7[%c0_20, %c0_21] : memref<8x128xf32, #tpu.memory_space<vmem>>, vector<8x128xf32>
    tpu.vector_store %arg7[%c0_20, %c0_21], %28 {strides = array<i32>} : memref<8x128xf32, #tpu.memory_space<vmem>>, vector<8x128xf32>,
    return
  }
  func.func @transform_0(%arg0: i32) -> (i32, i32) {
    %c0_i32 = arith.constant 0 : i32
    %c0_i32_0 = arith.constant 0 : i32
    return %arg0, %c0_i32 : i32, i32
  }
  func.func @transform_1(%arg0: i32) -> (i32, i32) {
    %c0_i32 = arith.constant 0 : i32
    %c0_i32_0 = arith.constant 0 : i32
    return %arg0, %c0_i32 : i32, i32
  }
  func.func @transform_2(%arg0: i32) -> (i32, i32) {
    %c0_i32 = arith.constant 0 : i32
    %c0_i32_0 = arith.constant 0 : i32
    %c0_i32_1 = arith.constant 0 : i32
    return %c0_i32, %c0_i32_0 : i32, i32
  }
  func.func @transform_3(%arg0: i32) -> (i32, i32) {
    %c0_i32 = arith.constant 0 : i32
    %c0_i32_0 = arith.constant 0 : i32
    %c0_i32_1 = arith.constant 0 : i32
    return %c0_i32, %c0_i32_0 : i32, i32
  }
  func.func @transform_4(%arg0: i32) -> (i32, i32) {
    %c0_i32 = arith.constant 0 : i32
    %c0_i32_0 = arith.constant 0 : i32
    return %arg0, %c0_i32 : i32, i32
  }
  func.func @transform_5(%arg0: i32) -> (i32, i32) {
    %c0_i32 = arith.constant 0 : i32
    %c0_i32_0 = arith.constant 0 : i32
    return %arg0, %c0_i32 : i32, i32
  }
  func.func @transform_6(%arg0: i32) -> (i32, i32) {
    %c0_i32 = arith.constant 0 : i32
    %c0_i32_0 = arith.constant 0 : i32
    return %arg0, %c0_i32 : i32, i32
  }
}

module attributes {stable_mosaic.version = 11 : i64} {
  func.func @_fused_conv_l1_kernel(%arg0: i32, %arg1: memref<128x72xbf16, #tpu.memory_space<vmem>>, %arg2: memref<128x72xbf16, #tpu.memory_space<vmem>>, %arg3: memref<72x128xbf16, #tpu.memory_space<vmem>>, %arg4: memref<1x128xf32, #tpu.memory_space<vmem>>, %arg5: memref<128x128xf32, #tpu.memory_space<vmem>>, %arg6: memref<128x128xf32, #tpu.memory_space<vmem>>, %arg7: memref<8x128xf32, #tpu.memory_space<vmem>>) attributes {dimension_semantics = [#tpu.dimension_semantics<parallel>], iteration_bounds = array<i64: 4>, scalar_prefetch = 0 : i64, scratch_operands = 0 : i64, tpu.core_type = #tpu.core_type<tc>, window_params = [{transform_indices = @transform_0, window_bounds = array<i64: 128, 72>}, {transform_indices = @transform_1, window_bounds = array<i64: 128, 72>}, {pipeline_mode = #tpu.pipeline_mode<synchronous>, transform_indices = @transform_2, window_bounds = array<i64: 72, 128>}, {pipeline_mode = #tpu.pipeline_mode<synchronous>, transform_indices = @transform_3, window_bounds = array<i64: 1, 128>}, {transform_indices = @transform_4, window_bounds = array<i64: 128, 128>}, {transform_indices = @transform_5, window_bounds = array<i64: 128, 128>}, {transform_indices = @transform_6, window_bounds = array<i64: 8, 128>}]} {
    %c0 = arith.constant 0 : index
    %c0_0 = arith.constant 0 : index
    %0 = vector.load %arg1[%c0, %c0_0] : memref<128x72xbf16, #tpu.memory_space<vmem>>, vector<128x72xbf16>
    %c0_1 = arith.constant 0 : index
    %c0_2 = arith.constant 0 : index
    %1 = vector.load %arg3[%c0_1, %c0_2] : memref<72x128xbf16, #tpu.memory_space<vmem>>, vector<72x128xbf16>
    %cst = arith.constant dense<0.000000e+00> : vector<128x128xf32>
    %2 = tpu.matmul %0, %1, %cst {dimension_numbers = #tpu.dot_dimension_numbers<[1], [0], [0], [1], [0, 0, 1, 1], [], []>} : vector<128x72xbf16>, vector<72x128xbf16>, vector<128x128xf32> -> vector<128x128xf32>
    %c0_3 = arith.constant 0 : index
    %c0_4 = arith.constant 0 : index
    %3 = vector.load %arg2[%c0_3, %c0_4] : memref<128x72xbf16, #tpu.memory_space<vmem>>, vector<128x72xbf16>
    %c0_5 = arith.constant 0 : index
    %c0_6 = arith.constant 0 : index
    %4 = vector.load %arg3[%c0_5, %c0_6] : memref<72x128xbf16, #tpu.memory_space<vmem>>, vector<72x128xbf16>
    %cst_7 = arith.constant dense<0.000000e+00> : vector<128x128xf32>
    %5 = tpu.matmul %3, %4, %cst_7 {dimension_numbers = #tpu.dot_dimension_numbers<[1], [0], [0], [1], [0, 0, 1, 1], [], []>} : vector<128x72xbf16>, vector<72x128xbf16>, vector<128x128xf32> -> vector<128x128xf32>
    %c0_8 = arith.constant 0 : index
    %c0_9 = arith.constant 0 : index
    %6 = vector.load %arg4[%c0_8, %c0_9] : memref<1x128xf32, #tpu.memory_space<vmem>>, vector<1x128xf32>
    %7 = vector.broadcast %6 : vector<1x128xf32> to vector<128x128xf32>
    %8 = arith.addf %2, %7 : vector<128x128xf32>
    %cst_10 = arith.constant 0.000000e+00 : f32
    %9 = vector.broadcast %cst_10 : f32 to vector<128x128xf32>
    %10 = arith.maximumf %8, %9 : vector<128x128xf32>
    %c0_11 = arith.constant 0 : index
    %c0_12 = arith.constant 0 : index
    %11 = vector.load %arg4[%c0_11, %c0_12] : memref<1x128xf32, #tpu.memory_space<vmem>>, vector<1x128xf32>
    %12 = vector.broadcast %11 : vector<1x128xf32> to vector<128x128xf32>
    %13 = arith.addf %5, %12 : vector<128x128xf32>
    %cst_13 = arith.constant 0.000000e+00 : f32
    %14 = vector.broadcast %cst_13 : f32 to vector<128x128xf32>
    %15 = arith.maximumf %13, %14 : vector<128x128xf32>
    %c0_14 = arith.constant 0 : index
    %c0_15 = arith.constant 0 : index
    %16 = vector.load %arg5[%c0_14, %c0_15] : memref<128x128xf32, #tpu.memory_space<vmem>>, vector<128x128xf32>
    tpu.vector_store %arg5[%c0_14, %c0_15], %10 {strides = array<i32>} : memref<128x128xf32, #tpu.memory_space<vmem>>, vector<128x128xf32>,
    %c0_16 = arith.constant 0 : index
    %c0_17 = arith.constant 0 : index
    %17 = vector.load %arg6[%c0_16, %c0_17] : memref<128x128xf32, #tpu.memory_space<vmem>>, vector<128x128xf32>
    tpu.vector_store %arg6[%c0_16, %c0_17], %15 {strides = array<i32>} : memref<128x128xf32, #tpu.memory_space<vmem>>, vector<128x128xf32>,
    %18 = arith.subf %10, %15 : vector<128x128xf32>
    %19 = math.absf %18 : vector<128x128xf32>
    %cst_18 = arith.constant dense<0.000000e+00> : vector<128xf32>
    %20 = vector.multi_reduction <add>, %19, %cst_18 [0] : vector<128x128xf32> to vector<128xf32>
    %21 = vector.shape_cast %20 : vector<128xf32> to vector<1x128xf32>
    %22 = tpu.iota {dimensions = array<i32: 0>} : vector<8x128xi32>
    %c0_i32 = arith.constant 0 : i32
    %23 = vector.broadcast %c0_i32 : i32 to vector<8x128xi32>
    %24 = arith.cmpi eq, %22, %23 : vector<8x128xi32>
    %cst_19 = arith.constant 0.000000e+00 : f32
    %25 = vector.shape_cast %21 : vector<1x128xf32> to vector<1x128xf32>
    %26 = vector.broadcast %25 : vector<1x128xf32> to vector<8x128xf32>
    %27 = vector.broadcast %cst_19 : f32 to vector<8x128xf32>
    %28 = arith.select %24, %26, %27 : vector<8x128xi1>, vector<8x128xf32>
    %c0_20 = arith.constant 0 : index
    %c0_21 = arith.constant 0 : index
    %29 = vector.load %arg7[%c0_20, %c0_21] : memref<8x128xf32, #tpu.memory_space<vmem>>, vector<8x128xf32>
    tpu.vector_store %arg7[%c0_20, %c0_21], %28 {strides = array<i32>} : memref<8x128xf32, #tpu.memory_space<vmem>>, vector<8x128xf32>,
    return
  }
  func.func @transform_0(%arg0: i32) -> (i32, i32) {
    %c0_i32 = arith.constant 0 : i32
    %c0_i32_0 = arith.constant 0 : i32
    return %arg0, %c0_i32 : i32, i32
  }
  func.func @transform_1(%arg0: i32) -> (i32, i32) {
    %c0_i32 = arith.constant 0 : i32
    %c0_i32_0 = arith.constant 0 : i32
    return %arg0, %c0_i32 : i32, i32
  }
  func.func @transform_2(%arg0: i32) -> (i32, i32) {
    %c0_i32 = arith.constant 0 : i32
    %c0_i32_0 = arith.constant 0 : i32
    %c0_i32_1 = arith.constant 0 : i32
    return %c0_i32, %c0_i32_0 : i32, i32
  }
  func.func @transform_3(%arg0: i32) -> (i32, i32) {
    %c0_i32 = arith.constant 0 : i32
    %c0_i32_0 = arith.constant 0 : i32
    %c0_i32_1 = arith.constant 0 : i32
    return %c0_i32, %c0_i32_0 : i32, i32
  }
  func.func @transform_4(%arg0: i32) -> (i32, i32) {
    %c0_i32 = arith.constant 0 : i32
    %c0_i32_0 = arith.constant 0 : i32
    return %arg0, %c0_i32 : i32, i32
  }
  func.func @transform_5(%arg0: i32) -> (i32, i32) {
    %c0_i32 = arith.constant 0 : i32
    %c0_i32_0 = arith.constant 0 : i32
    return %arg0, %c0_i32 : i32, i32
  }
  func.func @transform_6(%arg0: i32) -> (i32, i32) {
    %c0_i32 = arith.constant 0 : i32
    %c0_i32_0 = arith.constant 0 : i32
    return %arg0, %c0_i32 : i32, i32
  }
}

module attributes {stable_mosaic.version = 11 : i64} {
  func.func @_fused_conv_l1_kernel(%arg0: i32, %arg1: memref<128x144xbf16, #tpu.memory_space<vmem>>, %arg2: memref<128x144xbf16, #tpu.memory_space<vmem>>, %arg3: memref<144x128xbf16, #tpu.memory_space<vmem>>, %arg4: memref<1x128xf32, #tpu.memory_space<vmem>>, %arg5: memref<128x128xf32, #tpu.memory_space<vmem>>, %arg6: memref<128x128xf32, #tpu.memory_space<vmem>>, %arg7: memref<8x128xf32, #tpu.memory_space<vmem>>) attributes {dimension_semantics = [#tpu.dimension_semantics<parallel>], iteration_bounds = array<i64: 4>, scalar_prefetch = 0 : i64, scratch_operands = 0 : i64, tpu.core_type = #tpu.core_type<tc>, window_params = [{transform_indices = @transform_0, window_bounds = array<i64: 128, 144>}, {transform_indices = @transform_1, window_bounds = array<i64: 128, 144>}, {pipeline_mode = #tpu.pipeline_mode<synchronous>, transform_indices = @transform_2, window_bounds = array<i64: 144, 128>}, {pipeline_mode = #tpu.pipeline_mode<synchronous>, transform_indices = @transform_3, window_bounds = array<i64: 1, 128>}, {transform_indices = @transform_4, window_bounds = array<i64: 128, 128>}, {transform_indices = @transform_5, window_bounds = array<i64: 128, 128>}, {transform_indices = @transform_6, window_bounds = array<i64: 8, 128>}]} {
    %c0 = arith.constant 0 : index
    %c0_0 = arith.constant 0 : index
    %0 = vector.load %arg1[%c0, %c0_0] : memref<128x144xbf16, #tpu.memory_space<vmem>>, vector<128x144xbf16>
    %c0_1 = arith.constant 0 : index
    %c0_2 = arith.constant 0 : index
    %1 = vector.load %arg3[%c0_1, %c0_2] : memref<144x128xbf16, #tpu.memory_space<vmem>>, vector<144x128xbf16>
    %cst = arith.constant dense<0.000000e+00> : vector<128x128xf32>
    %2 = tpu.matmul %0, %1, %cst {dimension_numbers = #tpu.dot_dimension_numbers<[1], [0], [0], [1], [0, 0, 1, 1], [], []>} : vector<128x144xbf16>, vector<144x128xbf16>, vector<128x128xf32> -> vector<128x128xf32>
    %c0_3 = arith.constant 0 : index
    %c0_4 = arith.constant 0 : index
    %3 = vector.load %arg2[%c0_3, %c0_4] : memref<128x144xbf16, #tpu.memory_space<vmem>>, vector<128x144xbf16>
    %c0_5 = arith.constant 0 : index
    %c0_6 = arith.constant 0 : index
    %4 = vector.load %arg3[%c0_5, %c0_6] : memref<144x128xbf16, #tpu.memory_space<vmem>>, vector<144x128xbf16>
    %cst_7 = arith.constant dense<0.000000e+00> : vector<128x128xf32>
    %5 = tpu.matmul %3, %4, %cst_7 {dimension_numbers = #tpu.dot_dimension_numbers<[1], [0], [0], [1], [0, 0, 1, 1], [], []>} : vector<128x144xbf16>, vector<144x128xbf16>, vector<128x128xf32> -> vector<128x128xf32>
    %c0_8 = arith.constant 0 : index
    %c0_9 = arith.constant 0 : index
    %6 = vector.load %arg4[%c0_8, %c0_9] : memref<1x128xf32, #tpu.memory_space<vmem>>, vector<1x128xf32>
    %7 = vector.broadcast %6 : vector<1x128xf32> to vector<128x128xf32>
    %8 = arith.addf %2, %7 : vector<128x128xf32>
    %cst_10 = arith.constant 0.000000e+00 : f32
    %9 = vector.broadcast %cst_10 : f32 to vector<128x128xf32>
    %10 = arith.maximumf %8, %9 : vector<128x128xf32>
    %c0_11 = arith.constant 0 : index
    %c0_12 = arith.constant 0 : index
    %11 = vector.load %arg4[%c0_11, %c0_12] : memref<1x128xf32, #tpu.memory_space<vmem>>, vector<1x128xf32>
    %12 = vector.broadcast %11 : vector<1x128xf32> to vector<128x128xf32>
    %13 = arith.addf %5, %12 : vector<128x128xf32>
    %cst_13 = arith.constant 0.000000e+00 : f32
    %14 = vector.broadcast %cst_13 : f32 to vector<128x128xf32>
    %15 = arith.maximumf %13, %14 : vector<128x128xf32>
    %c0_14 = arith.constant 0 : index
    %c0_15 = arith.constant 0 : index
    %16 = vector.load %arg5[%c0_14, %c0_15] : memref<128x128xf32, #tpu.memory_space<vmem>>, vector<128x128xf32>
    tpu.vector_store %arg5[%c0_14, %c0_15], %10 {strides = array<i32>} : memref<128x128xf32, #tpu.memory_space<vmem>>, vector<128x128xf32>,
    %c0_16 = arith.constant 0 : index
    %c0_17 = arith.constant 0 : index
    %17 = vector.load %arg6[%c0_16, %c0_17] : memref<128x128xf32, #tpu.memory_space<vmem>>, vector<128x128xf32>
    tpu.vector_store %arg6[%c0_16, %c0_17], %15 {strides = array<i32>} : memref<128x128xf32, #tpu.memory_space<vmem>>, vector<128x128xf32>,
    %18 = arith.subf %10, %15 : vector<128x128xf32>
    %19 = math.absf %18 : vector<128x128xf32>
    %cst_18 = arith.constant dense<0.000000e+00> : vector<128xf32>
    %20 = vector.multi_reduction <add>, %19, %cst_18 [0] : vector<128x128xf32> to vector<128xf32>
    %21 = vector.shape_cast %20 : vector<128xf32> to vector<1x128xf32>
    %22 = tpu.iota {dimensions = array<i32: 0>} : vector<8x128xi32>
    %c0_i32 = arith.constant 0 : i32
    %23 = vector.broadcast %c0_i32 : i32 to vector<8x128xi32>
    %24 = arith.cmpi eq, %22, %23 : vector<8x128xi32>
    %cst_19 = arith.constant 0.000000e+00 : f32
    %25 = vector.shape_cast %21 : vector<1x128xf32> to vector<1x128xf32>
    %26 = vector.broadcast %25 : vector<1x128xf32> to vector<8x128xf32>
    %27 = vector.broadcast %cst_19 : f32 to vector<8x128xf32>
    %28 = arith.select %24, %26, %27 : vector<8x128xi1>, vector<8x128xf32>
    %c0_20 = arith.constant 0 : index
    %c0_21 = arith.constant 0 : index
    %29 = vector.load %arg7[%c0_20, %c0_21] : memref<8x128xf32, #tpu.memory_space<vmem>>, vector<8x128xf32>
    tpu.vector_store %arg7[%c0_20, %c0_21], %28 {strides = array<i32>} : memref<8x128xf32, #tpu.memory_space<vmem>>, vector<8x128xf32>,
    return
  }
  func.func @transform_0(%arg0: i32) -> (i32, i32) {
    %c0_i32 = arith.constant 0 : i32
    %c0_i32_0 = arith.constant 0 : i32
    return %arg0, %c0_i32 : i32, i32
  }
  func.func @transform_1(%arg0: i32) -> (i32, i32) {
    %c0_i32 = arith.constant 0 : i32
    %c0_i32_0 = arith.constant 0 : i32
    return %arg0, %c0_i32 : i32, i32
  }
  func.func @transform_2(%arg0: i32) -> (i32, i32) {
    %c0_i32 = arith.constant 0 : i32
    %c0_i32_0 = arith.constant 0 : i32
    %c0_i32_1 = arith.constant 0 : i32
    return %c0_i32, %c0_i32_0 : i32, i32
  }
  func.func @transform_3(%arg0: i32) -> (i32, i32) {
    %c0_i32 = arith.constant 0 : i32
    %c0_i32_0 = arith.constant 0 : i32
    %c0_i32_1 = arith.constant 0 : i32
    return %c0_i32, %c0_i32_0 : i32, i32
  }
  func.func @transform_4(%arg0: i32) -> (i32, i32) {
    %c0_i32 = arith.constant 0 : i32
    %c0_i32_0 = arith.constant 0 : i32
    return %arg0, %c0_i32 : i32, i32
  }
  func.func @transform_5(%arg0: i32) -> (i32, i32) {
    %c0_i32 = arith.constant 0 : i32
    %c0_i32_0 = arith.constant 0 : i32
    return %arg0, %c0_i32 : i32, i32
  }
  func.func @transform_6(%arg0: i32) -> (i32, i32) {
    %c0_i32 = arith.constant 0 : i32
    %c0_i32_0 = arith.constant 0 : i32
    return %arg0, %c0_i32 : i32, i32
  }
}

</mosaic_0001>

<llo_original>
// kernel: perceptual_loss.3
$region0: #{perceptual_loss.3}
  #allocation0 [shape = 'u32[]', space=smem, size = 0x4, offset = 0x4, fixed_abs, tag = 'smem constant byte address 0x4 - core index']
  #allocation1 [shape = 'u32[144,128]{1,0:T(1,128)}', space=vmem, size = 0x12000, scoped, tag = 'internal scratch']
  %s0 = inlined_call_operand.vmem [shape: bf16[512,36], index: 0, kind: input, shape index: {}]
  %s1 = inlined_call_operand.vmem [shape: bf16[512,36], index: 1, kind: input, shape index: {}]
  %s2 = inlined_call_operand.vmem [shape: bf16[36,128], index: 2, kind: input, shape index: {}]
  %s3 = inlined_call_operand.vmem [shape: f32[1,128], index: 3, kind: input, shape index: {}]
  %s4 = inlined_call_operand.vmem [shape: f32[512,128], index: 4, kind: output, shape index: {0}]
  %s5 = inlined_call_operand.vmem [shape: f32[512,128], index: 5, kind: output, shape index: {1}]
  %s6 = inlined_call_operand.vmem [shape: f32[32,128], index: 6, kind: output, shape index: {2}]
  %7 = xla_tuple %s4, %s5, %s6
  %s8 = sld [smem:[#allocation0]]
  $region65: #{perceptual_loss.3} parent=0
    _
  %s10 = ssub.s32 1, %s8
  %s11 = scalar_select 0, %s10, %s8
  loop: start=0, step=1, limit=6
  $region2: #{perceptual_loss.3} parent=0 // loop_pre_header
    _
  $region3: #{perceptual_loss.3} parent=0 // loop_header
    %s13 = sphi 0, %s17
    %p14 = scmp.ge.s32.totalorder %s13, 6
    %s23 = sphi 0, %s25
    %s26 = sphi 0, %s23
    %s27 = sphi 0, %s26
    %s43 = sphi 0, %s27
    %s49 = sphi 0, %s51
    %s52 = sphi 0, %s49
    %s53 = sphi 0, %s52
    %s69 = sphi 0, %s53
    %s73 = sphi 0, %s73
    %s75 = sphi 0, %s73
    %s76 = sphi 0, %s75
    %s90 = sphi 0, %s76
    %s94 = sphi 0, %s94
    %s96 = sphi 0, %s94
    %s97 = sphi 0, %s96
    %s111 = sphi 0, %s97
    %s117 = sphi 0, %s119
    %s120 = sphi 0, %s117
    %s121 = sphi 0, %s120
    %s137 = sphi 0, %s121
    %s143 = sphi 0, %s145
    %s146 = sphi 0, %s143
    %s147 = sphi 0, %s146
    %s163 = sphi 0, %s147
    %s169 = sphi 0, %s171
    %s172 = sphi 0, %s169
    %s173 = sphi 0, %s172
    %s189 = sphi 0, %s173
  $region4: #{perceptual_loss.3} parent=0 // loop_header_branch
    %16 = sbr.rel (%p14) target = $region8
  $region5: #{perceptual_loss.3} parent=0 // loop_body
    %s18 = ssub.s32 %s13, 1
    %s19 = ssub.s32 %s13, 2
    %s20 = sadd.s32 %s13, 1
    %s21 = ssub.s32 %s13, %s20
    %p22 = scmp.eq.s32.totalorder %s21, 0
    %s24 = sadd.s32 %s23, 1
    %s25 = scalar_select %p22, %s23, %s24
    %p28 = pneg %p22
    %p29 = scmp.eq.s32.totalorder %s13, 3
    %p30 = por %p28, %p29
    %p31 = scmp.ne.s32.totalorder %s23, %s26
    %p32 = scmp.eq.s32.totalorder %s13, 0
    %p33 = por %p31, %p32
    %p34 = scmp.ne.s32.totalorder %s23, %s26
    %p35 = scmp.eq.s32.totalorder %s18, 3
    %p36 = por %p34, %p35
    %p37 = scmp.ne.s32.totalorder %s26, %s27
    %p38 = scmp.eq.s32.totalorder %s18, 0
    %p39 = por %p37, %p38
    %p40 = scmp.ne.s32.totalorder %s26, %s27
    %p41 = scmp.eq.s32.totalorder %s19, 3
    %p42 = por %p40, %p41
    %p44 = scmp.ne.s32.totalorder %s27, %s43
    %p45 = scmp.eq.s32.totalorder %s19, 0
    %p46 = por %p44, %p45
    %s47 = ssub.s32 %s13, %s20
    %p48 = scmp.eq.s32.totalorder %s47, 0
    %s50 = sadd.s32 %s49, 1
    %s51 = scalar_select %p48, %s49, %s50
    %p54 = pneg %p48
    %p55 = scmp.eq.s32.totalorder %s13, 3
    %p56 = por %p54, %p55
    %p57 = scmp.ne.s32.totalorder %s49, %s52
    %p58 = scmp.eq.s32.totalorder %s13, 0
    %p59 = por %p57, %p58
    %p60 = scmp.ne.s32.totalorder %s49, %s52
    %p61 = scmp.eq.s32.totalorder %s18, 3
    %p62 = por %p60, %p61
    %p63 = scmp.ne.s32.totalorder %s52, %s53
    %p64 = scmp.eq.s32.totalorder %s18, 0
    %p65 = por %p63, %p64
    %p66 = scmp.ne.s32.totalorder %s52, %s53
    %p67 = scmp.eq.s32.totalorder %s19, 3
    %p68 = por %p66, %p67
    %p70 = scmp.ne.s32.totalorder %s53, %s69
    %p71 = scmp.eq.s32.totalorder %s19, 0
    %p72 = por %p70, %p71
    %s74 = sadd.s32 %s73, 1
    %p77 = scmp.eq.s32.totalorder %s13, 3
    %p78 = scmp.ne.s32.totalorder %s73, %s75
    %p79 = scmp.eq.s32.totalorder %s13, 0
    %p80 = por %p78, %p79
    %p81 = scmp.ne.s32.totalorder %s73, %s75
    %p82 = scmp.eq.s32.totalorder %s18, 3
    %p83 = por %p81, %p82
    %p84 = scmp.ne.s32.totalorder %s75, %s76
    %p85 = scmp.eq.s32.totalorder %s18, 0
    %p86 = por %p84, %p85
    %p87 = scmp.ne.s32.totalorder %s75, %s76
    %p88 = scmp.eq.s32.totalorder %s19, 3
    %p89 = por %p87, %p88
    %p91 = scmp.ne.s32.totalorder %s76, %s90
    %p92 = scmp.eq.s32.totalorder %s19, 0
    %p93 = por %p91, %p92
    %s95 = sadd.s32 %s94, 1
    %p98 = scmp.eq.s32.totalorder %s13, 3
    %p99 = scmp.ne.s32.totalorder %s94, %s96
    %p100 = scmp.eq.s32.totalorder %s13, 0
    %p101 = por %p99, %p100
    %p102 = scmp.ne.s32.totalorder %s94, %s96
    %p103 = scmp.eq.s32.totalorder %s18, 3
    %p104 = por %p102, %p103
    %p105 = scmp.ne.s32.totalorder %s96, %s97
    %p106 = scmp.eq.s32.totalorder %s18, 0
    %p107 = por %p105, %p106
    %p108 = scmp.ne.s32.totalorder %s96, %s97
    %p109 = scmp.eq.s32.totalorder %s19, 3
    %p110 = por %p108, %p109
    %p112 = scmp.ne.s32.totalorder %s97, %s111
    %p113 = scmp.eq.s32.totalorder %s19, 0
    %p114 = por %p112, %p113
    %s115 = ssub.s32 %s13, %s20
    %p116 = scmp.eq.s32.totalorder %s115, 0
    %s118 = sadd.s32 %s117, 1
    %s119 = scalar_select %p116, %s117, %s118
    %p122 = pneg %p116
    %p123 = scmp.eq.s32.totalorder %s13, 3
    %p124 = por %p122, %p123
    %p125 = scmp.ne.s32.totalorder %s117, %s120
    %p126 = scmp.eq.s32.totalorder %s13, 0
    %p127 = por %p125, %p126
    %p128 = scmp.ne.s32.totalorder %s117, %s120
    %p129 = scmp.eq.s32.totalorder %s18, 3
    %p130 = por %p128, %p129
    %p131 = scmp.ne.s32.totalorder %s120, %s121
    %p132 = scmp.eq.s32.totalorder %s18, 0
    %p133 = por %p131, %p132
    %p134 = scmp.ne.s32.totalorder %s120, %s121
    %p135 = scmp.eq.s32.totalorder %s19, 3
    %p136 = por %p134, %p135
    %p138 = scmp.ne.s32.totalorder %s121, %s137
    %p139 = scmp.eq.s32.totalorder %s19, 0
    %p140 = por %p138, %p139
    %s141 = ssub.s32 %s13, %s20
    %p142 = scmp.eq.s32.totalorder %s141, 0
    %s144 = sadd.s32 %s143, 1
    %s145 = scalar_select %p142, %s143, %s144
    %p148 = pneg %p142
    %p149 = scmp.eq.s32.totalorder %s13, 3
    %p150 = por %p148, %p149
    %p151 = scmp.ne.s32.totalorder %s143, %s146
    %p152 = scmp.eq.s32.totalorder %s13, 0
    %p153 = por %p151, %p152
    %p154 = scmp.ne.s32.totalorder %s143, %s146
    %p155 = scmp.eq.s32.totalorder %s18, 3
    %p156 = por %p154, %p155
    %p157 = scmp.ne.s32.totalorder %s146, %s147
    %p158 = scmp.eq.s32.totalorder %s18, 0
    %p159 = por %p157, %p158
    %p160 = scmp.ne.s32.totalorder %s146, %s147
    %p161 = scmp.eq.s32.totalorder %s19, 3
    %p162 = por %p160, %p161
    %p164 = scmp.ne.s32.totalorder %s147, %s163
    %p165 = scmp.eq.s32.totalorder %s19, 0
    %p166 = por %p164, %p165
    %s167 = ssub.s32 %s13, %s20
    %p168 = scmp.eq.s32.totalorder %s167, 0
    %s170 = sadd.s32 %s169, 1
    %s171 = scalar_select %p168, %s169, %s170
    %p174 = pneg %p168
    %p175 = scmp.eq.s32.totalorder %s13, 3
    %p176 = por %p174, %p175
    %p177 = scmp.ne.s32.totalorder %s169, %s172
    %p178 = scmp.eq.s32.totalorder %s13, 0
    %p179 = por %p177, %p178
    %p180 = scmp.ne.s32.totalorder %s169, %s172
    %p181 = scmp.eq.s32.totalorder %s18, 3
    %p182 = por %p180, %p181
    %p183 = scmp.ne.s32.totalorder %s172, %s173
    %p184 = scmp.eq.s32.totalorder %s18, 0
    %p185 = por %p183, %p184
    %p186 = scmp.ne.s32.totalorder %s172, %s173
    %p187 = scmp.eq.s32.totalorder %s19, 3
    %p188 = por %p186, %p187
    %p190 = scmp.ne.s32.totalorder %s173, %s189
    %p191 = scmp.eq.s32.totalorder %s19, 0
    %p192 = por %p190, %p191
    %p193 = scmp.le.s32.totalorder 1, %s13
    %p194 = scmp.lt.s32.totalorder %s13, 5
    %p195 = pnand %p193, %p194
    %p196 = pneg %p195
    // Predicated region
    $region9: #{perceptual_loss.3} parent=5 // pred_check
      _
    $region10: #{perceptual_loss.3} parent=5 // pred_check_branch
      %198 = sbr.rel (%p195) target = $region12
    $region11: #{perceptual_loss.3} parent=5 // pred_region
      %s199 = ssub.s32 %s13, 1
      // Predicated region
      $region13: #{perceptual_loss.3} parent=11 // pred_check
        %p200 = pneg %p86
      $region14: #{perceptual_loss.3} parent=11 // pred_check_branch
        %202 = sbr.rel (%p200) target = $region16
      $region15: #{perceptual_loss.3} parent=11 // pred_region
        _
      $region16: #{perceptual_loss.3} parent=11 // pred_fallthru
        _
      // Predicated region
      $region17: #{perceptual_loss.3} parent=11 // pred_check
        %p203 = pneg %p107
      $region18: #{perceptual_loss.3} parent=11 // pred_check_branch
        %205 = sbr.rel (%p203) target = $region20
      $region19: #{perceptual_loss.3} parent=11 // pred_region
        _
      $region20: #{perceptual_loss.3} parent=11 // pred_fallthru
        _
    $region12: #{perceptual_loss.3} parent=5 // pred_fallthru
      _
    %p206 = scmp.lt.s32.totalorder %s13, 4
    // Predicated region
    $region21: #{perceptual_loss.3} parent=5 // pred_check
      %p207 = pneg %p206
    $region22: #{perceptual_loss.3} parent=5 // pred_check_branch
      %209 = sbr.rel (%p207) target = $region24
    $region23: #{perceptual_loss.3} parent=5 // pred_region
      // Predicated region
      $region25: #{perceptual_loss.3} parent=23 // pred_check
        %p210 = pneg %p33
      $region26: #{perceptual_loss.3} parent=23 // pred_check_branch
        %212 = sbr.rel (%p210) target = $region28
      $region27: #{perceptual_loss.3} parent=23 // pred_region
        %s213 = smul.u32 16, %s13
        %p214 = scmp.lt.s32.totalorder %s213, 63
        %s215 = scalar_select %p214, %s213, 63
        %s216 = smul.addr %s215, 4
        %s217 = scalar_lea.vmem %s0, %s216
        %s218 = smul.u32 16, %s13
      $region28: #{perceptual_loss.3} parent=23 // pred_fallthru
        _
      // Predicated region
      $region29: #{perceptual_loss.3} parent=23 // pred_check
        %p219 = pneg %p59
      $region30: #{perceptual_loss.3} parent=23 // pred_check_branch
        %221 = sbr.rel (%p219) target = $region32
      $region31: #{perceptual_loss.3} parent=23 // pred_region
        %s222 = smul.u32 16, %s13
        %p223 = scmp.lt.s32.totalorder %s222, 63
        %s224 = scalar_select %p223, %s222, 63
        %s225 = smul.addr %s224, 4
        %s226 = scalar_lea.vmem %s1, %s225
        %s227 = smul.u32 16, %s13
      $region32: #{perceptual_loss.3} parent=23 // pred_fallthru
        _
    $region24: #{perceptual_loss.3} parent=5 // pred_fallthru
      _
    %p228 = scmp.le.s32.totalorder 1, %s13
    %p229 = scmp.lt.s32.totalorder %s13, 5
    %p230 = pnand %p228, %p229
    %p231 = pneg %p230
    // Predicated region
    $region33: #{perceptual_loss.3} parent=5 // pred_check
      _
    $region34: #{perceptual_loss.3} parent=5 // pred_check_branch
      %233 = sbr.rel (%p230) target = $region36
    $region35: #{perceptual_loss.3} parent=5 // pred_region
      %s234 = ssub.s32 %s13, 1
      %s235 = smul.u32 16, %s18
      %p236 = scmp.lt.s32.totalorder %s235, 63
      %s237 = scalar_select %p236, %s235, 63
      %s238 = smul.addr %s237, 4
      %s239 = scalar_lea.vmem %s0, %s238
      %p240 = pneg %p39
      %p241 = pneg %p36
      %s242 = smul.u32 16, %s18
      %p243 = scmp.lt.s32.totalorder %s242, 63
      %s244 = scalar_select %p243, %s242, 63
      %s245 = smul.addr %s244, 4
      %s246 = scalar_lea.vmem %s1, %s245
      %p247 = pneg %p65
      %p248 = pneg %p62
      %p249 = pneg %p86
      %p250 = pneg %p83
      %p251 = pneg %p107
      %p252 = pneg %p104
      %p253 = pneg %p133
      %p254 = pneg %p130
      %s255 = smul.u32 16, %s18
      %p256 = scmp.lt.s32.totalorder %s255, 63
      %s257 = scalar_select %p256, %s255, 63
      %s258 = smul.addr %s257, 8
      %s259 = scalar_lea.vmem %s4, %s258
      %p260 = pneg %p159
      %p261 = pneg %p156
      %s262 = smul.u32 16, %s18
      %p263 = scmp.lt.s32.totalorder %s262, 63
      %s264 = scalar_select %p263, %s262, 63
      %s265 = smul.addr %s264, 8
      %s266 = scalar_lea.vmem %s5, %s265
      %p267 = pneg %p185
      %p268 = pneg %p182
      %p269 = scmp.lt.s32.totalorder %s18, 3
      %s270 = scalar_select %p269, %s18, 3
      %s271 = smul.addr %s270, 8
      %s272 = scalar_lea.vmem %s6, %s271
      %s273 = smul.u32 16, %s18
      %p274 = scmp.lt.s32.totalorder %s273, 63
      %s275 = scalar_select %p274, %s273, 63
      %s276 = smul.addr %s275, 4
      %s277 = scalar_lea.vmem %s0, %s276
      %s278 = smul.u32 16, %s18
      %s279 = smul.u32 16, %s18
      %p280 = scmp.lt.s32.totalorder %s279, 63
      %s281 = scalar_select %p280, %s279, 63
      %s282 = smul.addr %s281, 4
      %s283 = scalar_lea.vmem %s1, %s282
      %s284 = smul.u32 16, %s18
      %s285 = smul.u32 16, %s18
      %p286 = scmp.lt.s32.totalorder %s285, 63
      %s287 = scalar_select %p286, %s285, 63
      %s288 = smul.addr %s287, 8
      %s289 = scalar_lea.vmem %s4, %s288
      %s290 = smul.u32 16, %s18
      %s291 = smul.u32 16, %s18
      %p292 = scmp.lt.s32.totalorder %s291, 63
      %s293 = scalar_select %p292, %s291, 63
      %s294 = smul.addr %s293, 8
      %s295 = scalar_lea.vmem %s5, %s294
      %s296 = smul.u32 16, %s18
      %p297 = scmp.lt.s32.totalorder %s18, 3
      %s298 = scalar_select %p297, %s18, 3
      %s299 = smul.addr %s298, 8
      %s300 = scalar_lea.vmem %s6, %s299
      %v302 = vld [vmem:[%s277] sm:$0xf]
      %v303 = vld [vmem:[%s277 + $0x4] sm:$0xf]
      %v304 = vld [vmem:[%s277 + $0x8] sm:$0xf]
      %v305 = vld [vmem:[%s277 + $0xc] sm:$0xf]
      %v306 = vld [vmem:[%s277 + $0x10] sm:$0xf]
      %v307 = vld [vmem:[%s277 + $0x14] sm:$0xf]
      %v308 = vld [vmem:[%s277 + $0x18] sm:$0xf]
      %v309 = vld [vmem:[%s277 + $0x1c] sm:$0xf]
      %v310 = vld [vmem:[%s277 + $0x20] sm:$0xf]
      %v311 = vld [vmem:[%s277 + $0x24] sm:$0xf]
      %v312 = vld [vmem:[%s277 + $0x28] sm:$0xf]
      %v313 = vld [vmem:[%s277 + $0x2c] sm:$0xf]
      %v314 = vld [vmem:[%s277 + $0x30] sm:$0xf]
      %v315 = vld [vmem:[%s277 + $0x34] sm:$0xf]
      %v316 = vld [vmem:[%s277 + $0x38] sm:$0xf]
      %v317 = vld [vmem:[%s277 + $0x3c] sm:$0xf]
      %v318 = vld [vmem:[%s2] sm:$0xf]
      %v319 = vld [vmem:[%s2 + $0x4] sm:$0xf]
      %v320 = vld [vmem:[%s2 + $0x8] sm:$0xf]
      %v321 = vld [vmem:[%s2 + $0xc] sm:$0xf]
      %v322 = vld [vmem:[%s2 + $0x10] sm:$0x3]
      %v323 = vld [vmem:[%s283] sm:$0xf]
      %v324 = vld [vmem:[%s283 + $0x4] sm:$0xf]
      %v325 = vld [vmem:[%s283 + $0x8] sm:$0xf]
      %v326 = vld [vmem:[%s283 + $0xc] sm:$0xf]
      %v327 = vld [vmem:[%s283 + $0x10] sm:$0xf]
      %v328 = vld [vmem:[%s283 + $0x14] sm:$0xf]
      %v329 = vld [vmem:[%s283 + $0x18] sm:$0xf]
      %v330 = vld [vmem:[%s283 + $0x1c] sm:$0xf]
      %v331 = vld [vmem:[%s283 + $0x20] sm:$0xf]
      %v332 = vld [vmem:[%s283 + $0x24] sm:$0xf]
      %v333 = vld [vmem:[%s283 + $0x28] sm:$0xf]
      %v334 = vld [vmem:[%s283 + $0x2c] sm:$0xf]
      %v335 = vld [vmem:[%s283 + $0x30] sm:$0xf]
      %v336 = vld [vmem:[%s283 + $0x34] sm:$0xf]
      %v337 = vld [vmem:[%s283 + $0x38] sm:$0xf]
      %v338 = vld [vmem:[%s283 + $0x3c] sm:$0xf]
      %v339 = vld [vmem:[%s3] sm:$0x1]
      %v341 = vlaneseq
      %v342 = vshrl.u32 %v341, 7
      %v343 = vsub.s32 0, %v342
      %v344 = vrot.slane %v339, %v343
      %v362 = vunpack.c.l.b16 %v302
      %v363 = vunpack.c.l.b16 %v303
      %v364 = vunpack.c.l.b16 %v304
      %v365 = vunpack.c.l.b16 %v305
      %v366 = vunpack.c.l.b16 %v306
      %v367 = vunpack.c.l.b16 %v307
      %v368 = vunpack.c.l.b16 %v308
      %v369 = vunpack.c.l.b16 %v309
      %v370 = vunpack.c.l.b16 %v310
      %v371 = vunpack.c.l.b16 %v311
      %v372 = vunpack.c.l.b16 %v312
      %v373 = vunpack.c.l.b16 %v313
      %v374 = vunpack.c.l.b16 %v314
      %v375 = vunpack.c.l.b16 %v315
      %v376 = vunpack.c.l.b16 %v316
      %v377 = vunpack.c.l.b16 %v317
      %v378 = vpack.c.b16 %v363, %v362
      %v379 = vpack.c.b16 %v365, %v364
      %v380 = vpack.c.b16 %v367, %v366
      %v381 = vpack.c.b16 %v369, %v368
      %v382 = vpack.c.b16 %v371, %v370
      %v383 = vpack.c.b16 %v373, %v372
      %v384 = vpack.c.b16 %v375, %v374
      %v385 = vpack.c.b16 %v377, %v376
      %v391 = vunpack.c.l.b16 %v318
      %v392 = vunpack.c.l.b16 %v319
      %v393 = vunpack.c.l.b16 %v320
      %v394 = vunpack.c.l.b16 %v321
      %v395 = vunpack.c.l.b16 %v322
      %v396 = vpack.c.b16 %v392, %v391
      %v397 = vpack.c.b16 %v394, %v393
      %v398 = vpack.c.b16 %v395, %v395
      %vm401 = vcmask 293888
      %v403 = vsel %vm401, %v378, 0
      %v406 = vsel %vm401, %v379, 0
      %v409 = vsel %vm401, %v380, 0
      %v412 = vsel %vm401, %v381, 0
      %v415 = vsel %vm401, %v382, 0
      %v418 = vsel %vm401, %v383, 0
      %v421 = vsel %vm401, %v384, 0
      %v424 = vsel %vm401, %v385, 0
      %vm426 = vcmask 1041408
      %v428 = vsel %vm426, %v398, 0
      %430 = vmatprep.subr.bf16.mxu0 0
      %431 = vmatpush1.bf16.msra.mxu0 %v396
      %432 = vmatprep.subr.bf16.mxu0 0
      %433 = vmatpush1.bf16.msra.mxu0 %v397
      %434 = vmatprep.subr.bf16.mxu0 0
      %435 = vmatpush1.bf16.msra.mxu0 %v428
      %436 = vmatprep.subr.bf16.mxu0 0
      %437 = vmatpush1.bf16.msra.mxu0 0
      %438 = vmatprep.subr.bf16.mxu0 0
      %439 = vmatpush1.bf16.msra.mxu0 0
      %440 = vmatprep.subr.bf16.mxu0 0
      %441 = vmatpush1.bf16.msra.mxu0 0
      %442 = vmatprep.subr.bf16.mxu0 0
      %443 = vmatpush1.bf16.msra.mxu0 0
      %444 = vmatprep.subr.bf16.mxu0 0
      %445 = vmatpush1.bf16.msra.mxu0 0
      %446 = vmatprep.subr.bf16.mxu0 0
      %447 = vmatpush1.bf16.msra.mxu0 0
      %448 = vmatprep.subr.bf16.mxu0 0
      %449 = vmatpush1.bf16.msra.mxu0 0
      %450 = vmatprep.subr.bf16.mxu0 0
      %451 = vmatpush1.bf16.msra.mxu0 0
      %452 = vmatprep.subr.bf16.mxu0 0
      %453 = vmatpush1.bf16.msra.mxu0 0
      %454 = vmatprep.subr.bf16.mxu0 0
      %455 = vmatpush1.bf16.msra.mxu0 0
      %456 = vmatprep.subr.bf16.mxu0 0
      %457 = vmatpush1.bf16.msra.mxu0 0
      %458 = vmatprep.subr.bf16.mxu0 0
      %459 = vmatpush1.bf16.msra.mxu0 0
      %460 = vmatprep.subr.bf16.mxu0 0
      %461 = vmatpush1.bf16.msra.mxu0 0
      %462 = vmatprep.mubr.bf16.mxu0 0
      %463 = vmatmul.mubr.bf16.gmra.mrb[0].mxu0 %v403
      %v464 = vpop.f32.mrb[0].mxu0
      %v465 = vadd.f32 %v344, %v464
      %v466 = vpop.f32.mrb[0].mxu0
      %v467 = vpop.f32.mrb[0].mxu0
      %v468 = vadd.f32 %v344, %v467
      %v469 = vpop.f32.mrb[0].mxu0
      %470 = vmatprep.mubr.bf16.mxu0 0
      %471 = vmatmul.mubr.bf16.gmra.mrb[0].mxu0 %v406
      %v472 = vpop.f32.mrb[0].mxu0
      %v473 = vadd.f32 %v344, %v472
      %v474 = vpop.f32.mrb[0].mxu0
      %v475 = vpop.f32.mrb[0].mxu0
      %v476 = vadd.f32 %v344, %v475
      %v477 = vpop.f32.mrb[0].mxu0
      %478 = vmatprep.mubr.bf16.mxu0 0
      %479 = vmatmul.mubr.bf16.gmra.mrb[0].mxu0 %v409
      %v480 = vpop.f32.mrb[0].mxu0
      %v481 = vadd.f32 %v344, %v480
      %v482 = vpop.f32.mrb[0].mxu0
      %v483 = vpop.f32.mrb[0].mxu0
      %v484 = vadd.f32 %v344, %v483
      %v485 = vpop.f32.mrb[0].mxu0
      %486 = vmatprep.mubr.bf16.mxu0 0
      %487 = vmatmul.mubr.bf16.gmra.mrb[0].mxu0 %v412
      %v488 = vpop.f32.mrb[0].mxu0
      %v489 = vadd.f32 %v344, %v488
      %v490 = vpop.f32.mrb[0].mxu0
      %v491 = vpop.f32.mrb[0].mxu0
      %v492 = vadd.f32 %v344, %v491
      %v493 = vpop.f32.mrb[0].mxu0
      %494 = vmatprep.mubr.bf16.mxu0 0
      %495 = vmatmul.mubr.bf16.gmra.mrb[0].mxu0 %v415
      %v496 = vpop.f32.mrb[0].mxu0
      %v497 = vadd.f32 %v344, %v496
      %v498 = vpop.f32.mrb[0].mxu0
      %v499 = vpop.f32.mrb[0].mxu0
      %v500 = vadd.f32 %v344, %v499
      %v501 = vpop.f32.mrb[0].mxu0
      %502 = vmatprep.mubr.bf16.mxu0 0
      %503 = vmatmul.mubr.bf16.gmra.mrb[0].mxu0 %v418
      %v504 = vpop.f32.mrb[0].mxu0
      %v505 = vadd.f32 %v344, %v504
      %v506 = vpop.f32.mrb[0].mxu0
      %v507 = vpop.f32.mrb[0].mxu0
      %v508 = vadd.f32 %v344, %v507
      %v509 = vpop.f32.mrb[0].mxu0
      %510 = vmatprep.mubr.bf16.mxu0 0
      %511 = vmatmul.mubr.bf16.gmra.mrb[0].mxu0 %v421
      %v512 = vpop.f32.mrb[0].mxu0
      %v513 = vadd.f32 %v344, %v512
      %v514 = vpop.f32.mrb[0].mxu0
      %v515 = vpop.f32.mrb[0].mxu0
      %v516 = vadd.f32 %v344, %v515
      %v517 = vpop.f32.mrb[0].mxu0
      %518 = vmatprep.mubr.bf16.mxu0 0
      %519 = vmatmul.mubr.bf16.gmra.mrb[0].mxu0 %v424
      %v520 = vpop.f32.mrb[0].mxu0
      %v521 = vadd.f32 %v344, %v520
      %v522 = vpop.f32.mrb[0].mxu0
      %v523 = vpop.f32.mrb[0].mxu0
      %v524 = vadd.f32 %v344, %v523
      %v525 = vpop.f32.mrb[0].mxu0
      %526 = vdwg.mxu0
      %v527 = vmax.f32 %v465, 0.0
      %v528 = vmax.f32 %v468, 0.0
      %v529 = vmax.f32 %v473, 0.0
      %v530 = vmax.f32 %v476, 0.0
      %v531 = vmax.f32 %v481, 0.0
      %v532 = vmax.f32 %v484, 0.0
      %v533 = vmax.f32 %v489, 0.0
      %v534 = vmax.f32 %v492, 0.0
      %v535 = vmax.f32 %v497, 0.0
      %v536 = vmax.f32 %v500, 0.0
      %v537 = vmax.f32 %v505, 0.0
      %v538 = vmax.f32 %v508, 0.0
      %v539 = vmax.f32 %v513, 0.0
      %v540 = vmax.f32 %v516, 0.0
      %v541 = vmax.f32 %v521, 0.0
      %v542 = vmax.f32 %v524, 0.0
      %v559 = vunpack.c.l.b16 %v323
      %v560 = vunpack.c.l.b16 %v324
      %v561 = vunpack.c.l.b16 %v325
      %v562 = vunpack.c.l.b16 %v326
      %v563 = vunpack.c.l.b16 %v327
      %v564 = vunpack.c.l.b16 %v328
      %v565 = vunpack.c.l.b16 %v329
      %v566 = vunpack.c.l.b16 %v330
      %v567 = vunpack.c.l.b16 %v331
      %v568 = vunpack.c.l.b16 %v332
      %v569 = vunpack.c.l.b16 %v333
      %v570 = vunpack.c.l.b16 %v334
      %v571 = vunpack.c.l.b16 %v335
      %v572 = vunpack.c.l.b16 %v336
      %v573 = vunpack.c.l.b16 %v337
      %v574 = vunpack.c.l.b16 %v338
      %v575 = vpack.c.b16 %v560, %v559
      %v576 = vpack.c.b16 %v562, %v561
      %v577 = vpack.c.b16 %v564, %v563
      %v578 = vpack.c.b16 %v566, %v565
      %v579 = vpack.c.b16 %v568, %v567
      %v580 = vpack.c.b16 %v570, %v569
      %v581 = vpack.c.b16 %v572, %v571
      %v582 = vpack.c.b16 %v574, %v573
      %v584 = vsel %vm401, %v575, 0
      %v587 = vsel %vm401, %v576, 0
      %v590 = vsel %vm401, %v577, 0
      %v593 = vsel %vm401, %v578, 0
      %v596 = vsel %vm401, %v579, 0
      %v599 = vsel %vm401, %v580, 0
      %v602 = vsel %vm401, %v581, 0
      %v605 = vsel %vm401, %v582, 0
      %607 = vmatprep.subr.bf16.mxu0 0
      %608 = vmatpush1.bf16.msra.mxu0 %v396
      %609 = vmatprep.subr.bf16.mxu0 0
      %610 = vmatpush1.bf16.msra.mxu0 %v397
      %611 = vmatprep.subr.bf16.mxu0 0
      %612 = vmatpush1.bf16.msra.mxu0 %v428
      %613 = vmatprep.subr.bf16.mxu0 0
      %614 = vmatpush1.bf16.msra.mxu0 0
      %615 = vmatprep.subr.bf16.mxu0 0
      %616 = vmatpush1.bf16.msra.mxu0 0
      %617 = vmatprep.subr.bf16.mxu0 0
      %618 = vmatpush1.bf16.msra.mxu0 0
      %619 = vmatprep.subr.bf16.mxu0 0
      %620 = vmatpush1.bf16.msra.mxu0 0
      %621 = vmatprep.subr.bf16.mxu0 0
      %622 = vmatpush1.bf16.msra.mxu0 0
      %623 = vmatprep.subr.bf16.mxu0 0
      %624 = vmatpush1.bf16.msra.mxu0 0
      %625 = vmatprep.subr.bf16.mxu0 0
      %626 = vmatpush1.bf16.msra.mxu0 0
      %627 = vmatprep.subr.bf16.mxu0 0
      %628 = vmatpush1.bf16.msra.mxu0 0
      %629 = vmatprep.subr.bf16.mxu0 0
      %630 = vmatpush1.bf16.msra.mxu0 0
      %631 = vmatprep.subr.bf16.mxu0 0
      %632 = vmatpush1.bf16.msra.mxu0 0
      %633 = vmatprep.subr.bf16.mxu0 0
      %634 = vmatpush1.bf16.msra.mxu0 0
      %635 = vmatprep.subr.bf16.mxu0 0
      %636 = vmatpush1.bf16.msra.mxu0 0
      %637 = vmatprep.subr.bf16.mxu0 0
      %638 = vmatpush1.bf16.msra.mxu0 0
      %639 = vmatprep.mubr.bf16.mxu0 0
      %640 = vmatmul.mubr.bf16.gmra.mrb[0].mxu0 %v584
      %v641 = vpop.f32.mrb[0].mxu0
      %v642 = vadd.f32 %v344, %v641
      %v643 = vpop.f32.mrb[0].mxu0
      %v644 = vpop.f32.mrb[0].mxu0
      %v645 = vadd.f32 %v344, %v644
      %v646 = vpop.f32.mrb[0].mxu0
      %647 = vmatprep.mubr.bf16.mxu0 0
      %648 = vmatmul.mubr.bf16.gmra.mrb[0].mxu0 %v587
      %v649 = vpop.f32.mrb[0].mxu0
      %v650 = vadd.f32 %v344, %v649
      %v651 = vpop.f32.mrb[0].mxu0
      %v652 = vpop.f32.mrb[0].mxu0
      %v653 = vadd.f32 %v344, %v652
      %v654 = vpop.f32.mrb[0].mxu0
      %655 = vmatprep.mubr.bf16.mxu0 0
      %656 = vmatmul.mubr.bf16.gmra.mrb[0].mxu0 %v590
      %v657 = vpop.f32.mrb[0].mxu0
      %v658 = vadd.f32 %v344, %v657
      %v659 = vpop.f32.mrb[0].mxu0
      %v660 = vpop.f32.mrb[0].mxu0
      %v661 = vadd.f32 %v344, %v660
      %v662 = vpop.f32.mrb[0].mxu0
      %663 = vmatprep.mubr.bf16.mxu0 0
      %664 = vmatmul.mubr.bf16.gmra.mrb[0].mxu0 %v593
      %v665 = vpop.f32.mrb[0].mxu0
      %v666 = vadd.f32 %v344, %v665
      %v667 = vpop.f32.mrb[0].mxu0
      %v668 = vpop.f32.mrb[0].mxu0
      %v669 = vadd.f32 %v344, %v668
      %v670 = vpop.f32.mrb[0].mxu0
      %671 = vmatprep.mubr.bf16.mxu0 0
      %672 = vmatmul.mubr.bf16.gmra.mrb[0].mxu0 %v596
      %v673 = vpop.f32.mrb[0].mxu0
      %v674 = vadd.f32 %v344, %v673
      %v675 = vpop.f32.mrb[0].mxu0
      %v676 = vpop.f32.mrb[0].mxu0
      %v677 = vadd.f32 %v344, %v676
      %v678 = vpop.f32.mrb[0].mxu0
      %679 = vmatprep.mubr.bf16.mxu0 0
      %680 = vmatmul.mubr.bf16.gmra.mrb[0].mxu0 %v599
      %v681 = vpop.f32.mrb[0].mxu0
      %v682 = vadd.f32 %v344, %v681
      %v683 = vpop.f32.mrb[0].mxu0
      %v684 = vpop.f32.mrb[0].mxu0
      %v685 = vadd.f32 %v344, %v684
      %v686 = vpop.f32.mrb[0].mxu0
      %687 = vmatprep.mubr.bf16.mxu0 0
      %688 = vmatmul.mubr.bf16.gmra.mrb[0].mxu0 %v602
      %v689 = vpop.f32.mrb[0].mxu0
      %v690 = vadd.f32 %v344, %v689
      %v691 = vpop.f32.mrb[0].mxu0
      %v692 = vpop.f32.mrb[0].mxu0
      %v693 = vadd.f32 %v344, %v692
      %v694 = vpop.f32.mrb[0].mxu0
      %695 = vmatprep.mubr.bf16.mxu0 0
      %696 = vmatmul.mubr.bf16.gmra.mrb[0].mxu0 %v605
      %v697 = vpop.f32.mrb[0].mxu0
      %v698 = vadd.f32 %v344, %v697
      %v699 = vpop.f32.mrb[0].mxu0
      %v700 = vpop.f32.mrb[0].mxu0
      %v701 = vadd.f32 %v344, %v700
      %v702 = vpop.f32.mrb[0].mxu0
      %703 = vdwg.mxu0
      %v704 = vmax.f32 %v642, 0.0
      %v705 = vmax.f32 %v645, 0.0
      %v706 = vmax.f32 %v650, 0.0
      %v707 = vmax.f32 %v653, 0.0
      %v708 = vmax.f32 %v658, 0.0
      %v709 = vmax.f32 %v661, 0.0
      %v710 = vmax.f32 %v666, 0.0
      %v711 = vmax.f32 %v669, 0.0
      %v712 = vmax.f32 %v674, 0.0
      %v713 = vmax.f32 %v677, 0.0
      %v714 = vmax.f32 %v682, 0.0
      %v715 = vmax.f32 %v685, 0.0
      %v716 = vmax.f32 %v690, 0.0
      %v717 = vmax.f32 %v693, 0.0
      %v718 = vmax.f32 %v698, 0.0
      %v719 = vmax.f32 %v701, 0.0
      %720 = vst [vmem:[%s289] sm:$0xff] %v527
      %721 = vst [vmem:[%s289 + $0x8] sm:$0xff] %v528
      %722 = vst [vmem:[%s289 + $0x10] sm:$0xff] %v529
      %723 = vst [vmem:[%s289 + $0x18] sm:$0xff] %v530
      %724 = vst [vmem:[%s289 + $0x20] sm:$0xff] %v531
      %725 = vst [vmem:[%s289 + $0x28] sm:$0xff] %v532
      %726 = vst [vmem:[%s289 + $0x30] sm:$0xff] %v533
      %727 = vst [vmem:[%s289 + $0x38] sm:$0xff] %v534
      %728 = vst [vmem:[%s289 + $0x40] sm:$0xff] %v535
      %729 = vst [vmem:[%s289 + $0x48] sm:$0xff] %v536
      %730 = vst [vmem:[%s289 + $0x50] sm:$0xff] %v537
      %731 = vst [vmem:[%s289 + $0x58] sm:$0xff] %v538
      %732 = vst [vmem:[%s289 + $0x60] sm:$0xff] %v539
      %733 = vst [vmem:[%s289 + $0x68] sm:$0xff] %v540
      %734 = vst [vmem:[%s289 + $0x70] sm:$0xff] %v541
      %735 = vst [vmem:[%s289 + $0x78] sm:$0xff] %v542
      %736 = vst [vmem:[%s295] sm:$0xff] %v704
      %737 = vst [vmem:[%s295 + $0x8] sm:$0xff] %v705
      %738 = vst [vmem:[%s295 + $0x10] sm:$0xff] %v706
      %739 = vst [vmem:[%s295 + $0x18] sm:$0xff] %v707
      %740 = vst [vmem:[%s295 + $0x20] sm:$0xff] %v708
      %741 = vst [vmem:[%s295 + $0x28] sm:$0xff] %v709
      %742 = vst [vmem:[%s295 + $0x30] sm:$0xff] %v710
      %743 = vst [vmem:[%s295 + $0x38] sm:$0xff] %v711
      %744 = vst [vmem:[%s295 + $0x40] sm:$0xff] %v712
      %745 = vst [vmem:[%s295 + $0x48] sm:$0xff] %v713
      %746 = vst [vmem:[%s295 + $0x50] sm:$0xff] %v714
      %747 = vst [vmem:[%s295 + $0x58] sm:$0xff] %v715
      %748 = vst [vmem:[%s295 + $0x60] sm:$0xff] %v716
      %749 = vst [vmem:[%s295 + $0x68] sm:$0xff] %v717
      %750 = vst [vmem:[%s295 + $0x70] sm:$0xff] %v718
      %751 = vst [vmem:[%s295 + $0x78] sm:$0xff] %v719
      %v752 = vsub.f32 %v527, %v704
      %v753 = vsub.f32 %v528, %v705
      %v754 = vsub.f32 %v529, %v706
      %v755 = vsub.f32 %v530, %v707
      %v756 = vsub.f32 %v531, %v708
      %v757 = vsub.f32 %v532, %v709
      %v758 = vsub.f32 %v533, %v710
      %v759 = vsub.f32 %v534, %v711
      %v760 = vsub.f32 %v535, %v712
      %v761 = vsub.f32 %v536, %v713
      %v762 = vsub.f32 %v537, %v714
      %v763 = vsub.f32 %v538, %v715
      %v764 = vsub.f32 %v539, %v716
      %v765 = vsub.f32 %v540, %v717
      %v766 = vsub.f32 %v541, %v718
      %v767 = vsub.f32 %v542, %v719
      %v768 = vand.u32 2147483647, %v752
      %v769 = vand.u32 2147483647, %v753
      %v770 = vand.u32 2147483647, %v754
      %v771 = vand.u32 2147483647, %v755
      %v772 = vand.u32 2147483647, %v756
      %v773 = vand.u32 2147483647, %v757
      %v774 = vand.u32 2147483647, %v758
      %v775 = vand.u32 2147483647, %v759
      %v776 = vand.u32 2147483647, %v760
      %v777 = vand.u32 2147483647, %v761
      %v778 = vand.u32 2147483647, %v762
      %v779 = vand.u32 2147483647, %v763
      %v780 = vand.u32 2147483647, %v764
      %v781 = vand.u32 2147483647, %v765
      %v782 = vand.u32 2147483647, %v766
      %v783 = vand.u32 2147483647, %v767
      %v784 = vadd.f32 %v768, %v769
      %v785 = vadd.f32 %v784, %v770
      %v786 = vadd.f32 %v785, %v771
      %v787 = vadd.f32 %v786, %v772
      %v788 = vadd.f32 %v787, %v773
      %v789 = vadd.f32 %v788, %v774
      %v790 = vadd.f32 %v789, %v775
      %v791 = vadd.f32 %v790, %v776
      %v792 = vadd.f32 %v791, %v777
      %v793 = vadd.f32 %v792, %v778
      %v794 = vadd.f32 %v793, %v779
      %v795 = vadd.f32 %v794, %v780
      %v796 = vadd.f32 %v795, %v781
      %v797 = vadd.f32 %v796, %v782
      %v798 = vadd.f32 %v797, %v783
      %v799 = vrot.slane %v798, 4
      %v800 = vadd.f32 %v798, %v799
      %v801 = vrot.slane %v800, 2
      %v802 = vadd.f32 %v800, %v801
      %v803 = vrot.slane %v802, 1
      %v804 = vadd.f32 %v802, %v803
      %v805 = vlaneseq
      %v806 = vshrl.u32 %v805, 7
      %vm807 = vcmp.eq.s32.totalorder %v806, 0
      %v808 = vsel %vm807, %v804, 0.0
      %809 = vst [vmem:[%s300] sm:$0xff] %v808
      %s810 = smul.u32 16, %s18
      %p811 = scmp.lt.s32.totalorder %s810, 63
      %s812 = scalar_select %p811, %s810, 63
      %s813 = smul.addr %s812, 8
      %s814 = scalar_lea.vmem %s4, %s813
      %s815 = smul.u32 16, %s18
      %p816 = scmp.lt.s32.totalorder %s815, 63
      %s817 = scalar_select %p816, %s815, 63
      %s818 = smul.addr %s817, 8
      %s819 = scalar_lea.vmem %s5, %s818
      %p820 = scmp.lt.s32.totalorder %s18, 3
      %s821 = scalar_select %p820, %s18, 3
      %s822 = smul.addr %s821, 8
      %s823 = scalar_lea.vmem %s6, %s822
      // Predicated region
      $region37: #{perceptual_loss.3} parent=35 // pred_check
        %p824 = pneg %p130
      $region38: #{perceptual_loss.3} parent=35 // pred_check_branch
        %826 = sbr.rel (%p824) target = $region40
      $region39: #{perceptual_loss.3} parent=35 // pred_region
        %s827 = smul.u32 16, %s18
      $region40: #{perceptual_loss.3} parent=35 // pred_fallthru
        _
      // Predicated region
      $region41: #{perceptual_loss.3} parent=35 // pred_check
        %p828 = pneg %p156
      $region42: #{perceptual_loss.3} parent=35 // pred_check_branch
        %830 = sbr.rel (%p828) target = $region44
      $region43: #{perceptual_loss.3} parent=35 // pred_region
        %s831 = smul.u32 16, %s18
      $region44: #{perceptual_loss.3} parent=35 // pred_fallthru
        _
      // Predicated region
      $region45: #{perceptual_loss.3} parent=35 // pred_check
        %p832 = pneg %p182
      $region46: #{perceptual_loss.3} parent=35 // pred_check_branch
        %834 = sbr.rel (%p832) target = $region48
      $region47: #{perceptual_loss.3} parent=35 // pred_region
        _
      $region48: #{perceptual_loss.3} parent=35 // pred_fallthru
        _
    $region36: #{perceptual_loss.3} parent=5 // pred_fallthru
      _
    %p835 = scmp.le.s32.totalorder 2, %s13
    // Predicated region
    $region49: #{perceptual_loss.3} parent=5 // pred_check
      %p836 = pneg %p835
    $region50: #{perceptual_loss.3} parent=5 // pred_check_branch
      %838 = sbr.rel (%p836) target = $region52
    $region51: #{perceptual_loss.3} parent=5 // pred_region
      %s839 = ssub.s32 %s13, 2
      // Predicated region
      $region53: #{perceptual_loss.3} parent=51 // pred_check
        %p840 = pneg %p136
      $region54: #{perceptual_loss.3} parent=51 // pred_check_branch
        %842 = sbr.rel (%p840) target = $region56
      $region55: #{perceptual_loss.3} parent=51 // pred_region
        %s843 = smul.u32 16, %s19
        %p844 = scmp.lt.s32.totalorder %s843, 63
        %s845 = scalar_select %p844, %s843, 63
        %s846 = smul.addr %s845, 8
        %s847 = scalar_lea.vmem %s4, %s846
      $region56: #{perceptual_loss.3} parent=51 // pred_fallthru
        _
      // Predicated region
      $region57: #{perceptual_loss.3} parent=51 // pred_check
        %p848 = pneg %p162
      $region58: #{perceptual_loss.3} parent=51 // pred_check_branch
        %850 = sbr.rel (%p848) target = $region60
      $region59: #{perceptual_loss.3} parent=51 // pred_region
        %s851 = smul.u32 16, %s19
        %p852 = scmp.lt.s32.totalorder %s851, 63
        %s853 = scalar_select %p852, %s851, 63
        %s854 = smul.addr %s853, 8
        %s855 = scalar_lea.vmem %s5, %s854
      $region60: #{perceptual_loss.3} parent=51 // pred_fallthru
        _
      // Predicated region
      $region61: #{perceptual_loss.3} parent=51 // pred_check
        %p856 = pneg %p188
      $region62: #{perceptual_loss.3} parent=51 // pred_check_branch
        %858 = sbr.rel (%p856) target = $region64
      $region63: #{perceptual_loss.3} parent=51 // pred_region
        %p859 = scmp.lt.s32.totalorder %s19, 3
        %s860 = scalar_select %p859, %s19, 3
        %s861 = smul.addr %s860, 8
        %s862 = scalar_lea.vmem %s6, %s861
      $region64: #{perceptual_loss.3} parent=51 // pred_fallthru
        _
    $region52: #{perceptual_loss.3} parent=5 // pred_fallthru
      _
  $region6: #{perceptual_loss.3} parent=0 // loop_footer
    %s17 = sadd.s32 1, %s13
  $region7: #{perceptual_loss.3} parent=0 // loop_footer_branch
    %12 = sbr.rel target = $region3
  $region8: #{perceptual_loss.3} parent=0 // loop_exit
    _

// kernel: perceptual_loss.4
$region0: #{perceptual_loss.4}
  #allocation0 [shape = 'u32[]', space=smem, size = 0x4, offset = 0x4, fixed_abs, tag = 'smem constant byte address 0x4 - core index']
  #allocation1 [shape = 'u32[144,128]{1,0:T(1,128)}', space=vmem, size = 0x12000, scoped, tag = 'internal scratch']
  %s0 = inlined_call_operand.vmem [shape: bf16[512,72], index: 0, kind: input, shape index: {}]
  %s1 = inlined_call_operand.vmem [shape: bf16[512,72], index: 1, kind: input, shape index: {}]
  %s2 = inlined_call_operand.vmem [shape: bf16[72,128], index: 2, kind: input, shape index: {}]
  %s3 = inlined_call_operand.vmem [shape: f32[1,128], index: 3, kind: input, shape index: {}]
  %s4 = inlined_call_operand.vmem [shape: f32[512,128], index: 4, kind: output, shape index: {0}]
  %s5 = inlined_call_operand.vmem [shape: f32[512,128], index: 5, kind: output, shape index: {1}]
  %s6 = inlined_call_operand.vmem [shape: f32[32,128], index: 6, kind: output, shape index: {2}]
  %7 = xla_tuple %s4, %s5, %s6
  %s8 = sld [smem:[#allocation0]]
  $region65: #{perceptual_loss.4} parent=0
    _
  %s10 = ssub.s32 1, %s8
  %s11 = scalar_select 0, %s10, %s8
  loop: start=0, step=1, limit=6
  $region2: #{perceptual_loss.4} parent=0 // loop_pre_header
    _
  $region3: #{perceptual_loss.4} parent=0 // loop_header
    %s13 = sphi 0, %s17
    %p14 = scmp.ge.s32.totalorder %s13, 6
    %s23 = sphi 0, %s25
    %s26 = sphi 0, %s23
    %s27 = sphi 0, %s26
    %s43 = sphi 0, %s27
    %s49 = sphi 0, %s51
    %s52 = sphi 0, %s49
    %s53 = sphi 0, %s52
    %s69 = sphi 0, %s53
    %s73 = sphi 0, %s73
    %s75 = sphi 0, %s73
    %s76 = sphi 0, %s75
    %s90 = sphi 0, %s76
    %s94 = sphi 0, %s94
    %s96 = sphi 0, %s94
    %s97 = sphi 0, %s96
    %s111 = sphi 0, %s97
    %s117 = sphi 0, %s119
    %s120 = sphi 0, %s117
    %s121 = sphi 0, %s120
    %s137 = sphi 0, %s121
    %s143 = sphi 0, %s145
    %s146 = sphi 0, %s143
    %s147 = sphi 0, %s146
    %s163 = sphi 0, %s147
    %s169 = sphi 0, %s171
    %s172 = sphi 0, %s169
    %s173 = sphi 0, %s172
    %s189 = sphi 0, %s173
  $region4: #{perceptual_loss.4} parent=0 // loop_header_branch
    %16 = sbr.rel (%p14) target = $region8
  $region5: #{perceptual_loss.4} parent=0 // loop_body
    %s18 = ssub.s32 %s13, 1
    %s19 = ssub.s32 %s13, 2
    %s20 = sadd.s32 %s13, 1
    %s21 = ssub.s32 %s13, %s20
    %p22 = scmp.eq.s32.totalorder %s21, 0
    %s24 = sadd.s32 %s23, 1
    %s25 = scalar_select %p22, %s23, %s24
    %p28 = pneg %p22
    %p29 = scmp.eq.s32.totalorder %s13, 3
    %p30 = por %p28, %p29
    %p31 = scmp.ne.s32.totalorder %s23, %s26
    %p32 = scmp.eq.s32.totalorder %s13, 0
    %p33 = por %p31, %p32
    %p34 = scmp.ne.s32.totalorder %s23, %s26
    %p35 = scmp.eq.s32.totalorder %s18, 3
    %p36 = por %p34, %p35
    %p37 = scmp.ne.s32.totalorder %s26, %s27
    %p38 = scmp.eq.s32.totalorder %s18, 0
    %p39 = por %p37, %p38
    %p40 = scmp.ne.s32.totalorder %s26, %s27
    %p41 = scmp.eq.s32.totalorder %s19, 3
    %p42 = por %p40, %p41
    %p44 = scmp.ne.s32.totalorder %s27, %s43
    %p45 = scmp.eq.s32.totalorder %s19, 0
    %p46 = por %p44, %p45
    %s47 = ssub.s32 %s13, %s20
    %p48 = scmp.eq.s32.totalorder %s47, 0
    %s50 = sadd.s32 %s49, 1
    %s51 = scalar_select %p48, %s49, %s50
    %p54 = pneg %p48
    %p55 = scmp.eq.s32.totalorder %s13, 3
    %p56 = por %p54, %p55
    %p57 = scmp.ne.s32.totalorder %s49, %s52
    %p58 = scmp.eq.s32.totalorder %s13, 0
    %p59 = por %p57, %p58
    %p60 = scmp.ne.s32.totalorder %s49, %s52
    %p61 = scmp.eq.s32.totalorder %s18, 3
    %p62 = por %p60, %p61
    %p63 = scmp.ne.s32.totalorder %s52, %s53
    %p64 = scmp.eq.s32.totalorder %s18, 0
    %p65 = por %p63, %p64
    %p66 = scmp.ne.s32.totalorder %s52, %s53
    %p67 = scmp.eq.s32.totalorder %s19, 3
    %p68 = por %p66, %p67
    %p70 = scmp.ne.s32.totalorder %s53, %s69
    %p71 = scmp.eq.s32.totalorder %s19, 0
    %p72 = por %p70, %p71
    %s74 = sadd.s32 %s73, 1
    %p77 = scmp.eq.s32.totalorder %s13, 3
    %p78 = scmp.ne.s32.totalorder %s73, %s75
    %p79 = scmp.eq.s32.totalorder %s13, 0
    %p80 = por %p78, %p79
    %p81 = scmp.ne.s32.totalorder %s73, %s75
    %p82 = scmp.eq.s32.totalorder %s18, 3
    %p83 = por %p81, %p82
    %p84 = scmp.ne.s32.totalorder %s75, %s76
    %p85 = scmp.eq.s32.totalorder %s18, 0
    %p86 = por %p84, %p85
    %p87 = scmp.ne.s32.totalorder %s75, %s76
    %p88 = scmp.eq.s32.totalorder %s19, 3
    %p89 = por %p87, %p88
    %p91 = scmp.ne.s32.totalorder %s76, %s90
    %p92 = scmp.eq.s32.totalorder %s19, 0
    %p93 = por %p91, %p92
    %s95 = sadd.s32 %s94, 1
    %p98 = scmp.eq.s32.totalorder %s13, 3
    %p99 = scmp.ne.s32.totalorder %s94, %s96
    %p100 = scmp.eq.s32.totalorder %s13, 0
    %p101 = por %p99, %p100
    %p102 = scmp.ne.s32.totalorder %s94, %s96
    %p103 = scmp.eq.s32.totalorder %s18, 3
    %p104 = por %p102, %p103
    %p105 = scmp.ne.s32.totalorder %s96, %s97
    %p106 = scmp.eq.s32.totalorder %s18, 0
    %p107 = por %p105, %p106
    %p108 = scmp.ne.s32.totalorder %s96, %s97
    %p109 = scmp.eq.s32.totalorder %s19, 3
    %p110 = por %p108, %p109
    %p112 = scmp.ne.s32.totalorder %s97, %s111
    %p113 = scmp.eq.s32.totalorder %s19, 0
    %p114 = por %p112, %p113
    %s115 = ssub.s32 %s13, %s20
    %p116 = scmp.eq.s32.totalorder %s115, 0
    %s118 = sadd.s32 %s117, 1
    %s119 = scalar_select %p116, %s117, %s118
    %p122 = pneg %p116
    %p123 = scmp.eq.s32.totalorder %s13, 3
    %p124 = por %p122, %p123
    %p125 = scmp.ne.s32.totalorder %s117, %s120
    %p126 = scmp.eq.s32.totalorder %s13, 0
    %p127 = por %p125, %p126
    %p128 = scmp.ne.s32.totalorder %s117, %s120
    %p129 = scmp.eq.s32.totalorder %s18, 3
    %p130 = por %p128, %p129
    %p131 = scmp.ne.s32.totalorder %s120, %s121
    %p132 = scmp.eq.s32.totalorder %s18, 0
    %p133 = por %p131, %p132
    %p134 = scmp.ne.s32.totalorder %s120, %s121
    %p135 = scmp.eq.s32.totalorder %s19, 3
    %p136 = por %p134, %p135
    %p138 = scmp.ne.s32.totalorder %s121, %s137
    %p139 = scmp.eq.s32.totalorder %s19, 0
    %p140 = por %p138, %p139
    %s141 = ssub.s32 %s13, %s20
    %p142 = scmp.eq.s32.totalorder %s141, 0
    %s144 = sadd.s32 %s143, 1
    %s145 = scalar_select %p142, %s143, %s144
    %p148 = pneg %p142
    %p149 = scmp.eq.s32.totalorder %s13, 3
    %p150 = por %p148, %p149
    %p151 = scmp.ne.s32.totalorder %s143, %s146
    %p152 = scmp.eq.s32.totalorder %s13, 0
    %p153 = por %p151, %p152
    %p154 = scmp.ne.s32.totalorder %s143, %s146
    %p155 = scmp.eq.s32.totalorder %s18, 3
    %p156 = por %p154, %p155
    %p157 = scmp.ne.s32.totalorder %s146, %s147
    %p158 = scmp.eq.s32.totalorder %s18, 0
    %p159 = por %p157, %p158
    %p160 = scmp.ne.s32.totalorder %s146, %s147
    %p161 = scmp.eq.s32.totalorder %s19, 3
    %p162 = por %p160, %p161
    %p164 = scmp.ne.s32.totalorder %s147, %s163
    %p165 = scmp.eq.s32.totalorder %s19, 0
    %p166 = por %p164, %p165
    %s167 = ssub.s32 %s13, %s20
    %p168 = scmp.eq.s32.totalorder %s167, 0
    %s170 = sadd.s32 %s169, 1
    %s171 = scalar_select %p168, %s169, %s170
    %p174 = pneg %p168
    %p175 = scmp.eq.s32.totalorder %s13, 3
    %p176 = por %p174, %p175
    %p177 = scmp.ne.s32.totalorder %s169, %s172
    %p178 = scmp.eq.s32.totalorder %s13, 0
    %p179 = por %p177, %p178
    %p180 = scmp.ne.s32.totalorder %s169, %s172
    %p181 = scmp.eq.s32.totalorder %s18, 3
    %p182 = por %p180, %p181
    %p183 = scmp.ne.s32.totalorder %s172, %s173
    %p184 = scmp.eq.s32.totalorder %s18, 0
    %p185 = por %p183, %p184
    %p186 = scmp.ne.s32.totalorder %s172, %s173
    %p187 = scmp.eq.s32.totalorder %s19, 3
    %p188 = por %p186, %p187
    %p190 = scmp.ne.s32.totalorder %s173, %s189
    %p191 = scmp.eq.s32.totalorder %s19, 0
    %p192 = por %p190, %p191
    %p193 = scmp.le.s32.totalorder 1, %s13
    %p194 = scmp.lt.s32.totalorder %s13, 5
    %p195 = pnand %p193, %p194
    %p196 = pneg %p195
    // Predicated region
    $region9: #{perceptual_loss.4} parent=5 // pred_check
      _
    $region10: #{perceptual_loss.4} parent=5 // pred_check_branch
      %198 = sbr.rel (%p195) target = $region12
    $region11: #{perceptual_loss.4} parent=5 // pred_region
      %s199 = ssub.s32 %s13, 1
      // Predicated region
      $region13: #{perceptual_loss.4} parent=11 // pred_check
        %p200 = pneg %p86
      $region14: #{perceptual_loss.4} parent=11 // pred_check_branch
        %202 = sbr.rel (%p200) target = $region16
      $region15: #{perceptual_loss.4} parent=11 // pred_region
        _
      $region16: #{perceptual_loss.4} parent=11 // pred_fallthru
        _
      // Predicated region
      $region17: #{perceptual_loss.4} parent=11 // pred_check
        %p203 = pneg %p107
      $region18: #{perceptual_loss.4} parent=11 // pred_check_branch
        %205 = sbr.rel (%p203) target = $region20
      $region19: #{perceptual_loss.4} parent=11 // pred_region
        _
      $region20: #{perceptual_loss.4} parent=11 // pred_fallthru
        _
    $region12: #{perceptual_loss.4} parent=5 // pred_fallthru
      _
    %p206 = scmp.lt.s32.totalorder %s13, 4
    // Predicated region
    $region21: #{perceptual_loss.4} parent=5 // pred_check
      %p207 = pneg %p206
    $region22: #{perceptual_loss.4} parent=5 // pred_check_branch
      %209 = sbr.rel (%p207) target = $region24
    $region23: #{perceptual_loss.4} parent=5 // pred_region
      // Predicated region
      $region25: #{perceptual_loss.4} parent=23 // pred_check
        %p210 = pneg %p33
      $region26: #{perceptual_loss.4} parent=23 // pred_check_branch
        %212 = sbr.rel (%p210) target = $region28
      $region27: #{perceptual_loss.4} parent=23 // pred_region
        %s213 = smul.u32 16, %s13
        %p214 = scmp.lt.s32.totalorder %s213, 63
        %s215 = scalar_select %p214, %s213, 63
        %s216 = smul.addr %s215, 4
        %s217 = scalar_lea.vmem %s0, %s216
        %s218 = smul.u32 16, %s13
      $region28: #{perceptual_loss.4} parent=23 // pred_fallthru
        _
      // Predicated region
      $region29: #{perceptual_loss.4} parent=23 // pred_check
        %p219 = pneg %p59
      $region30: #{perceptual_loss.4} parent=23 // pred_check_branch
        %221 = sbr.rel (%p219) target = $region32
      $region31: #{perceptual_loss.4} parent=23 // pred_region
        %s222 = smul.u32 16, %s13
        %p223 = scmp.lt.s32.totalorder %s222, 63
        %s224 = scalar_select %p223, %s222, 63
        %s225 = smul.addr %s224, 4
        %s226 = scalar_lea.vmem %s1, %s225
        %s227 = smul.u32 16, %s13
      $region32: #{perceptual_loss.4} parent=23 // pred_fallthru
        _
    $region24: #{perceptual_loss.4} parent=5 // pred_fallthru
      _
    %p228 = scmp.le.s32.totalorder 1, %s13
    %p229 = scmp.lt.s32.totalorder %s13, 5
    %p230 = pnand %p228, %p229
    %p231 = pneg %p230
    // Predicated region
    $region33: #{perceptual_loss.4} parent=5 // pred_check
      _
    $region34: #{perceptual_loss.4} parent=5 // pred_check_branch
      %233 = sbr.rel (%p230) target = $region36
    $region35: #{perceptual_loss.4} parent=5 // pred_region
      %s234 = ssub.s32 %s13, 1
      %s235 = smul.u32 16, %s18
      %p236 = scmp.lt.s32.totalorder %s235, 63
      %s237 = scalar_select %p236, %s235, 63
      %s238 = smul.addr %s237, 4
      %s239 = scalar_lea.vmem %s0, %s238
      %p240 = pneg %p39
      %p241 = pneg %p36
      %s242 = smul.u32 16, %s18
      %p243 = scmp.lt.s32.totalorder %s242, 63
      %s244 = scalar_select %p243, %s242, 63
      %s245 = smul.addr %s244, 4
      %s246 = scalar_lea.vmem %s1, %s245
      %p247 = pneg %p65
      %p248 = pneg %p62
      %p249 = pneg %p86
      %p250 = pneg %p83
      %p251 = pneg %p107
      %p252 = pneg %p104
      %p253 = pneg %p133
      %p254 = pneg %p130
      %s255 = smul.u32 16, %s18
      %p256 = scmp.lt.s32.totalorder %s255, 63
      %s257 = scalar_select %p256, %s255, 63
      %s258 = smul.addr %s257, 8
      %s259 = scalar_lea.vmem %s4, %s258
      %p260 = pneg %p159
      %p261 = pneg %p156
      %s262 = smul.u32 16, %s18
      %p263 = scmp.lt.s32.totalorder %s262, 63
      %s264 = scalar_select %p263, %s262, 63
      %s265 = smul.addr %s264, 8
      %s266 = scalar_lea.vmem %s5, %s265
      %p267 = pneg %p185
      %p268 = pneg %p182
      %p269 = scmp.lt.s32.totalorder %s18, 3
      %s270 = scalar_select %p269, %s18, 3
      %s271 = smul.addr %s270, 8
      %s272 = scalar_lea.vmem %s6, %s271
      %s273 = smul.u32 16, %s18
      %p274 = scmp.lt.s32.totalorder %s273, 63
      %s275 = scalar_select %p274, %s273, 63
      %s276 = smul.addr %s275, 4
      %s277 = scalar_lea.vmem %s0, %s276
      %s278 = smul.u32 16, %s18
      %s279 = smul.u32 16, %s18
      %p280 = scmp.lt.s32.totalorder %s279, 63
      %s281 = scalar_select %p280, %s279, 63
      %s282 = smul.addr %s281, 4
      %s283 = scalar_lea.vmem %s1, %s282
      %s284 = smul.u32 16, %s18
      %s285 = smul.u32 16, %s18
      %p286 = scmp.lt.s32.totalorder %s285, 63
      %s287 = scalar_select %p286, %s285, 63
      %s288 = smul.addr %s287, 8
      %s289 = scalar_lea.vmem %s4, %s288
      %s290 = smul.u32 16, %s18
      %s291 = smul.u32 16, %s18
      %p292 = scmp.lt.s32.totalorder %s291, 63
      %s293 = scalar_select %p292, %s291, 63
      %s294 = smul.addr %s293, 8
      %s295 = scalar_lea.vmem %s5, %s294
      %s296 = smul.u32 16, %s18
      %p297 = scmp.lt.s32.totalorder %s18, 3
      %s298 = scalar_select %p297, %s18, 3
      %s299 = smul.addr %s298, 8
      %s300 = scalar_lea.vmem %s6, %s299
      %v302 = vld [vmem:[%s277] sm:$0xf]
      %v303 = vld [vmem:[%s277 + $0x4] sm:$0xf]
      %v304 = vld [vmem:[%s277 + $0x8] sm:$0xf]
      %v305 = vld [vmem:[%s277 + $0xc] sm:$0xf]
      %v306 = vld [vmem:[%s277 + $0x10] sm:$0xf]
      %v307 = vld [vmem:[%s277 + $0x14] sm:$0xf]
      %v308 = vld [vmem:[%s277 + $0x18] sm:$0xf]
      %v309 = vld [vmem:[%s277 + $0x1c] sm:$0xf]
      %v310 = vld [vmem:[%s277 + $0x20] sm:$0xf]
      %v311 = vld [vmem:[%s277 + $0x24] sm:$0xf]
      %v312 = vld [vmem:[%s277 + $0x28] sm:$0xf]
      %v313 = vld [vmem:[%s277 + $0x2c] sm:$0xf]
      %v314 = vld [vmem:[%s277 + $0x30] sm:$0xf]
      %v315 = vld [vmem:[%s277 + $0x34] sm:$0xf]
      %v316 = vld [vmem:[%s277 + $0x38] sm:$0xf]
      %v317 = vld [vmem:[%s277 + $0x3c] sm:$0xf]
      %v318 = vld [vmem:[%s2] sm:$0xf]
      %v319 = vld [vmem:[%s2 + $0x4] sm:$0xf]
      %v320 = vld [vmem:[%s2 + $0x8] sm:$0xf]
      %v321 = vld [vmem:[%s2 + $0xc] sm:$0xf]
      %v322 = vld [vmem:[%s2 + $0x10] sm:$0xf]
      %v323 = vld [vmem:[%s2 + $0x14] sm:$0xf]
      %v324 = vld [vmem:[%s2 + $0x18] sm:$0xf]
      %v325 = vld [vmem:[%s2 + $0x1c] sm:$0xf]
      %v326 = vld [vmem:[%s2 + $0x20] sm:$0xf]
      %v327 = vld [vmem:[%s283] sm:$0xf]
      %v328 = vld [vmem:[%s283 + $0x4] sm:$0xf]
      %v329 = vld [vmem:[%s283 + $0x8] sm:$0xf]
      %v330 = vld [vmem:[%s283 + $0xc] sm:$0xf]
      %v331 = vld [vmem:[%s283 + $0x10] sm:$0xf]
      %v332 = vld [vmem:[%s283 + $0x14] sm:$0xf]
      %v333 = vld [vmem:[%s283 + $0x18] sm:$0xf]
      %v334 = vld [vmem:[%s283 + $0x1c] sm:$0xf]
      %v335 = vld [vmem:[%s283 + $0x20] sm:$0xf]
      %v336 = vld [vmem:[%s283 + $0x24] sm:$0xf]
      %v337 = vld [vmem:[%s283 + $0x28] sm:$0xf]
      %v338 = vld [vmem:[%s283 + $0x2c] sm:$0xf]
      %v339 = vld [vmem:[%s283 + $0x30] sm:$0xf]
      %v340 = vld [vmem:[%s283 + $0x34] sm:$0xf]
      %v341 = vld [vmem:[%s283 + $0x38] sm:$0xf]
      %v342 = vld [vmem:[%s283 + $0x3c] sm:$0xf]
      %v343 = vld [vmem:[%s3] sm:$0x1]
      %v345 = vlaneseq
      %v346 = vshrl.u32 %v345, 7
      %v347 = vsub.s32 0, %v346
      %v348 = vrot.slane %v343, %v347
      %v366 = vunpack.c.l.b16 %v302
      %v367 = vunpack.c.l.b16 %v303
      %v368 = vunpack.c.l.b16 %v304
      %v369 = vunpack.c.l.b16 %v305
      %v370 = vunpack.c.l.b16 %v306
      %v371 = vunpack.c.l.b16 %v307
      %v372 = vunpack.c.l.b16 %v308
      %v373 = vunpack.c.l.b16 %v309
      %v374 = vunpack.c.l.b16 %v310
      %v375 = vunpack.c.l.b16 %v311
      %v376 = vunpack.c.l.b16 %v312
      %v377 = vunpack.c.l.b16 %v313
      %v378 = vunpack.c.l.b16 %v314
      %v379 = vunpack.c.l.b16 %v315
      %v380 = vunpack.c.l.b16 %v316
      %v381 = vunpack.c.l.b16 %v317
      %v382 = vpack.c.b16 %v367, %v366
      %v383 = vpack.c.b16 %v369, %v368
      %v384 = vpack.c.b16 %v371, %v370
      %v385 = vpack.c.b16 %v373, %v372
      %v386 = vpack.c.b16 %v375, %v374
      %v387 = vpack.c.b16 %v377, %v376
      %v388 = vpack.c.b16 %v379, %v378
      %v389 = vpack.c.b16 %v381, %v380
      %v399 = vunpack.c.l.b16 %v318
      %v400 = vunpack.c.l.b16 %v319
      %v401 = vunpack.c.l.b16 %v320
      %v402 = vunpack.c.l.b16 %v321
      %v403 = vunpack.c.l.b16 %v322
      %v404 = vunpack.c.l.b16 %v323
      %v405 = vunpack.c.l.b16 %v324
      %v406 = vunpack.c.l.b16 %v325
      %v407 = vunpack.c.l.b16 %v326
      %v408 = vpack.c.b16 %v400, %v399
      %v409 = vpack.c.b16 %v402, %v401
      %v410 = vpack.c.b16 %v404, %v403
      %v411 = vpack.c.b16 %v406, %v405
      %v412 = vpack.c.b16 %v407, %v407
      %vm417 = vcmask 588800
      %v419 = vsel %vm417, %v382, 0
      %v422 = vsel %vm417, %v383, 0
      %v425 = vsel %vm417, %v384, 0
      %v428 = vsel %vm417, %v385, 0
      %v431 = vsel %vm417, %v386, 0
      %v434 = vsel %vm417, %v387, 0
      %v437 = vsel %vm417, %v388, 0
      %v440 = vsel %vm417, %v389, 0
      %vm442 = vcmask 1043456
      %v444 = vsel %vm442, %v412, 0
      %446 = vmatprep.subr.bf16.mxu0 0
      %447 = vmatpush1.bf16.msra.mxu0 %v408
      %448 = vmatprep.subr.bf16.mxu0 0
      %449 = vmatpush1.bf16.msra.mxu0 %v409
      %450 = vmatprep.subr.bf16.mxu0 0
      %451 = vmatpush1.bf16.msra.mxu0 %v410
      %452 = vmatprep.subr.bf16.mxu0 0
      %453 = vmatpush1.bf16.msra.mxu0 %v411
      %454 = vmatprep.subr.bf16.mxu0 0
      %455 = vmatpush1.bf16.msra.mxu0 %v444
      %456 = vmatprep.subr.bf16.mxu0 0
      %457 = vmatpush1.bf16.msra.mxu0 0
      %458 = vmatprep.subr.bf16.mxu0 0
      %459 = vmatpush1.bf16.msra.mxu0 0
      %460 = vmatprep.subr.bf16.mxu0 0
      %461 = vmatpush1.bf16.msra.mxu0 0
      %462 = vmatprep.subr.bf16.mxu0 0
      %463 = vmatpush1.bf16.msra.mxu0 0
      %464 = vmatprep.subr.bf16.mxu0 0
      %465 = vmatpush1.bf16.msra.mxu0 0
      %466 = vmatprep.subr.bf16.mxu0 0
      %467 = vmatpush1.bf16.msra.mxu0 0
      %468 = vmatprep.subr.bf16.mxu0 0
      %469 = vmatpush1.bf16.msra.mxu0 0
      %470 = vmatprep.subr.bf16.mxu0 0
      %471 = vmatpush1.bf16.msra.mxu0 0
      %472 = vmatprep.subr.bf16.mxu0 0
      %473 = vmatpush1.bf16.msra.mxu0 0
      %474 = vmatprep.subr.bf16.mxu0 0
      %475 = vmatpush1.bf16.msra.mxu0 0
      %476 = vmatprep.subr.bf16.mxu0 0
      %477 = vmatpush1.bf16.msra.mxu0 0
      %478 = vmatprep.mubr.bf16.mxu0 0
      %479 = vmatmul.mubr.bf16.gmra.mrb[0].mxu0 %v419
      %v480 = vpop.f32.mrb[0].mxu0
      %v481 = vadd.f32 %v348, %v480
      %v482 = vpop.f32.mrb[0].mxu0
      %v483 = vpop.f32.mrb[0].mxu0
      %v484 = vadd.f32 %v348, %v483
      %v485 = vpop.f32.mrb[0].mxu0
      %486 = vmatprep.mubr.bf16.mxu0 0
      %487 = vmatmul.mubr.bf16.gmra.mrb[0].mxu0 %v422
      %v488 = vpop.f32.mrb[0].mxu0
      %v489 = vadd.f32 %v348, %v488
      %v490 = vpop.f32.mrb[0].mxu0
      %v491 = vpop.f32.mrb[0].mxu0
      %v492 = vadd.f32 %v348, %v491
      %v493 = vpop.f32.mrb[0].mxu0
      %494 = vmatprep.mubr.bf16.mxu0 0
      %495 = vmatmul.mubr.bf16.gmra.mrb[0].mxu0 %v425
      %v496 = vpop.f32.mrb[0].mxu0
      %v497 = vadd.f32 %v348, %v496
      %v498 = vpop.f32.mrb[0].mxu0
      %v499 = vpop.f32.mrb[0].mxu0
      %v500 = vadd.f32 %v348, %v499
      %v501 = vpop.f32.mrb[0].mxu0
      %502 = vmatprep.mubr.bf16.mxu0 0
      %503 = vmatmul.mubr.bf16.gmra.mrb[0].mxu0 %v428
      %v504 = vpop.f32.mrb[0].mxu0
      %v505 = vadd.f32 %v348, %v504
      %v506 = vpop.f32.mrb[0].mxu0
      %v507 = vpop.f32.mrb[0].mxu0
      %v508 = vadd.f32 %v348, %v507
      %v509 = vpop.f32.mrb[0].mxu0
      %510 = vmatprep.mubr.bf16.mxu0 0
      %511 = vmatmul.mubr.bf16.gmra.mrb[0].mxu0 %v431
      %v512 = vpop.f32.mrb[0].mxu0
      %v513 = vadd.f32 %v348, %v512
      %v514 = vpop.f32.mrb[0].mxu0
      %v515 = vpop.f32.mrb[0].mxu0
      %v516 = vadd.f32 %v348, %v515
      %v517 = vpop.f32.mrb[0].mxu0
      %518 = vmatprep.mubr.bf16.mxu0 0
      %519 = vmatmul.mubr.bf16.gmra.mrb[0].mxu0 %v434
      %v520 = vpop.f32.mrb[0].mxu0
      %v521 = vadd.f32 %v348, %v520
      %v522 = vpop.f32.mrb[0].mxu0
      %v523 = vpop.f32.mrb[0].mxu0
      %v524 = vadd.f32 %v348, %v523
      %v525 = vpop.f32.mrb[0].mxu0
      %526 = vmatprep.mubr.bf16.mxu0 0
      %527 = vmatmul.mubr.bf16.gmra.mrb[0].mxu0 %v437
      %v528 = vpop.f32.mrb[0].mxu0
      %v529 = vadd.f32 %v348, %v528
      %v530 = vpop.f32.mrb[0].mxu0
      %v531 = vpop.f32.mrb[0].mxu0
      %v532 = vadd.f32 %v348, %v531
      %v533 = vpop.f32.mrb[0].mxu0
      %534 = vmatprep.mubr.bf16.mxu0 0
      %535 = vmatmul.mubr.bf16.gmra.mrb[0].mxu0 %v440
      %v536 = vpop.f32.mrb[0].mxu0
      %v537 = vadd.f32 %v348, %v536
      %v538 = vpop.f32.mrb[0].mxu0
      %v539 = vpop.f32.mrb[0].mxu0
      %v540 = vadd.f32 %v348, %v539
      %v541 = vpop.f32.mrb[0].mxu0
      %542 = vdwg.mxu0
      %v543 = vmax.f32 %v481, 0.0
      %v544 = vmax.f32 %v484, 0.0
      %v545 = vmax.f32 %v489, 0.0
      %v546 = vmax.f32 %v492, 0.0
      %v547 = vmax.f32 %v497, 0.0
      %v548 = vmax.f32 %v500, 0.0
      %v549 = vmax.f32 %v505, 0.0
      %v550 = vmax.f32 %v508, 0.0
      %v551 = vmax.f32 %v513, 0.0
      %v552 = vmax.f32 %v516, 0.0
      %v553 = vmax.f32 %v521, 0.0
      %v554 = vmax.f32 %v524, 0.0
      %v555 = vmax.f32 %v529, 0.0
      %v556 = vmax.f32 %v532, 0.0
      %v557 = vmax.f32 %v537, 0.0
      %v558 = vmax.f32 %v540, 0.0
      %v575 = vunpack.c.l.b16 %v327
      %v576 = vunpack.c.l.b16 %v328
      %v577 = vunpack.c.l.b16 %v329
      %v578 = vunpack.c.l.b16 %v330
      %v579 = vunpack.c.l.b16 %v331
      %v580 = vunpack.c.l.b16 %v332
      %v581 = vunpack.c.l.b16 %v333
      %v582 = vunpack.c.l.b16 %v334
      %v583 = vunpack.c.l.b16 %v335
      %v584 = vunpack.c.l.b16 %v336
      %v585 = vunpack.c.l.b16 %v337
      %v586 = vunpack.c.l.b16 %v338
      %v587 = vunpack.c.l.b16 %v339
      %v588 = vunpack.c.l.b16 %v340
      %v589 = vunpack.c.l.b16 %v341
      %v590 = vunpack.c.l.b16 %v342
      %v591 = vpack.c.b16 %v576, %v575
      %v592 = vpack.c.b16 %v578, %v577
      %v593 = vpack.c.b16 %v580, %v579
      %v594 = vpack.c.b16 %v582, %v581
      %v595 = vpack.c.b16 %v584, %v583
      %v596 = vpack.c.b16 %v586, %v585
      %v597 = vpack.c.b16 %v588, %v587
      %v598 = vpack.c.b16 %v590, %v589
      %v600 = vsel %vm417, %v591, 0
      %v603 = vsel %vm417, %v592, 0
      %v606 = vsel %vm417, %v593, 0
      %v609 = vsel %vm417, %v594, 0
      %v612 = vsel %vm417, %v595, 0
      %v615 = vsel %vm417, %v596, 0
      %v618 = vsel %vm417, %v597, 0
      %v621 = vsel %vm417, %v598, 0
      %623 = vmatprep.subr.bf16.mxu0 0
      %624 = vmatpush1.bf16.msra.mxu0 %v408
      %625 = vmatprep.subr.bf16.mxu0 0
      %626 = vmatpush1.bf16.msra.mxu0 %v409
      %627 = vmatprep.subr.bf16.mxu0 0
      %628 = vmatpush1.bf16.msra.mxu0 %v410
      %629 = vmatprep.subr.bf16.mxu0 0
      %630 = vmatpush1.bf16.msra.mxu0 %v411
      %631 = vmatprep.subr.bf16.mxu0 0
      %632 = vmatpush1.bf16.msra.mxu0 %v444
      %633 = vmatprep.subr.bf16.mxu0 0
      %634 = vmatpush1.bf16.msra.mxu0 0
      %635 = vmatprep.subr.bf16.mxu0 0
      %636 = vmatpush1.bf16.msra.mxu0 0
      %637 = vmatprep.subr.bf16.mxu0 0
      %638 = vmatpush1.bf16.msra.mxu0 0
      %639 = vmatprep.subr.bf16.mxu0 0
      %640 = vmatpush1.bf16.msra.mxu0 0
      %641 = vmatprep.subr.bf16.mxu0 0
      %642 = vmatpush1.bf16.msra.mxu0 0
      %643 = vmatprep.subr.bf16.mxu0 0
      %644 = vmatpush1.bf16.msra.mxu0 0
      %645 = vmatprep.subr.bf16.mxu0 0
      %646 = vmatpush1.bf16.msra.mxu0 0
      %647 = vmatprep.subr.bf16.mxu0 0
      %648 = vmatpush1.bf16.msra.mxu0 0
      %649 = vmatprep.subr.bf16.mxu0 0
      %650 = vmatpush1.bf16.msra.mxu0 0
      %651 = vmatprep.subr.bf16.mxu0 0
      %652 = vmatpush1.bf16.msra.mxu0 0
      %653 = vmatprep.subr.bf16.mxu0 0
      %654 = vmatpush1.bf16.msra.mxu0 0
      %655 = vmatprep.mubr.bf16.mxu0 0
      %656 = vmatmul.mubr.bf16.gmra.mrb[0].mxu0 %v600
      %v657 = vpop.f32.mrb[0].mxu0
      %v658 = vadd.f32 %v348, %v657
      %v659 = vpop.f32.mrb[0].mxu0
      %v660 = vpop.f32.mrb[0].mxu0
      %v661 = vadd.f32 %v348, %v660
      %v662 = vpop.f32.mrb[0].mxu0
      %663 = vmatprep.mubr.bf16.mxu0 0
      %664 = vmatmul.mubr.bf16.gmra.mrb[0].mxu0 %v603
      %v665 = vpop.f32.mrb[0].mxu0
      %v666 = vadd.f32 %v348, %v665
      %v667 = vpop.f32.mrb[0].mxu0
      %v668 = vpop.f32.mrb[0].mxu0
      %v669 = vadd.f32 %v348, %v668
      %v670 = vpop.f32.mrb[0].mxu0
      %671 = vmatprep.mubr.bf16.mxu0 0
      %672 = vmatmul.mubr.bf16.gmra.mrb[0].mxu0 %v606
      %v673 = vpop.f32.mrb[0].mxu0
      %v674 = vadd.f32 %v348, %v673
      %v675 = vpop.f32.mrb[0].mxu0
      %v676 = vpop.f32.mrb[0].mxu0
      %v677 = vadd.f32 %v348, %v676
      %v678 = vpop.f32.mrb[0].mxu0
      %679 = vmatprep.mubr.bf16.mxu0 0
      %680 = vmatmul.mubr.bf16.gmra.mrb[0].mxu0 %v609
      %v681 = vpop.f32.mrb[0].mxu0
      %v682 = vadd.f32 %v348, %v681
      %v683 = vpop.f32.mrb[0].mxu0
      %v684 = vpop.f32.mrb[0].mxu0
      %v685 = vadd.f32 %v348, %v684
      %v686 = vpop.f32.mrb[0].mxu0
      %687 = vmatprep.mubr.bf16.mxu0 0
      %688 = vmatmul.mubr.bf16.gmra.mrb[0].mxu0 %v612
      %v689 = vpop.f32.mrb[0].mxu0
      %v690 = vadd.f32 %v348, %v689
      %v691 = vpop.f32.mrb[0].mxu0
      %v692 = vpop.f32.mrb[0].mxu0
      %v693 = vadd.f32 %v348, %v692
      %v694 = vpop.f32.mrb[0].mxu0
      %695 = vmatprep.mubr.bf16.mxu0 0
      %696 = vmatmul.mubr.bf16.gmra.mrb[0].mxu0 %v615
      %v697 = vpop.f32.mrb[0].mxu0
      %v698 = vadd.f32 %v348, %v697
      %v699 = vpop.f32.mrb[0].mxu0
      %v700 = vpop.f32.mrb[0].mxu0
      %v701 = vadd.f32 %v348, %v700
      %v702 = vpop.f32.mrb[0].mxu0
      %703 = vmatprep.mubr.bf16.mxu0 0
      %704 = vmatmul.mubr.bf16.gmra.mrb[0].mxu0 %v618
      %v705 = vpop.f32.mrb[0].mxu0
      %v706 = vadd.f32 %v348, %v705
      %v707 = vpop.f32.mrb[0].mxu0
      %v708 = vpop.f32.mrb[0].mxu0
      %v709 = vadd.f32 %v348, %v708
      %v710 = vpop.f32.mrb[0].mxu0
      %711 = vmatprep.mubr.bf16.mxu0 0
      %712 = vmatmul.mubr.bf16.gmra.mrb[0].mxu0 %v621
      %v713 = vpop.f32.mrb[0].mxu0
      %v714 = vadd.f32 %v348, %v713
      %v715 = vpop.f32.mrb[0].mxu0
      %v716 = vpop.f32.mrb[0].mxu0
      %v717 = vadd.f32 %v348, %v716
      %v718 = vpop.f32.mrb[0].mxu0
      %719 = vdwg.mxu0
      %v720 = vmax.f32 %v658, 0.0
      %v721 = vmax.f32 %v661, 0.0
      %v722 = vmax.f32 %v666, 0.0
      %v723 = vmax.f32 %v669, 0.0
      %v724 = vmax.f32 %v674, 0.0
      %v725 = vmax.f32 %v677, 0.0
      %v726 = vmax.f32 %v682, 0.0
      %v727 = vmax.f32 %v685, 0.0
      %v728 = vmax.f32 %v690, 0.0
      %v729 = vmax.f32 %v693, 0.0
      %v730 = vmax.f32 %v698, 0.0
      %v731 = vmax.f32 %v701, 0.0
      %v732 = vmax.f32 %v706, 0.0
      %v733 = vmax.f32 %v709, 0.0
      %v734 = vmax.f32 %v714, 0.0
      %v735 = vmax.f32 %v717, 0.0
      %736 = vst [vmem:[%s289] sm:$0xff] %v543
      %737 = vst [vmem:[%s289 + $0x8] sm:$0xff] %v544
      %738 = vst [vmem:[%s289 + $0x10] sm:$0xff] %v545
      %739 = vst [vmem:[%s289 + $0x18] sm:$0xff] %v546
      %740 = vst [vmem:[%s289 + $0x20] sm:$0xff] %v547
      %741 = vst [vmem:[%s289 + $0x28] sm:$0xff] %v548
      %742 = vst [vmem:[%s289 + $0x30] sm:$0xff] %v549
      %743 = vst [vmem:[%s289 + $0x38] sm:$0xff] %v550
      %744 = vst [vmem:[%s289 + $0x40] sm:$0xff] %v551
      %745 = vst [vmem:[%s289 + $0x48] sm:$0xff] %v552
      %746 = vst [vmem:[%s289 + $0x50] sm:$0xff] %v553
      %747 = vst [vmem:[%s289 + $0x58] sm:$0xff] %v554
      %748 = vst [vmem:[%s289 + $0x60] sm:$0xff] %v555
      %749 = vst [vmem:[%s289 + $0x68] sm:$0xff] %v556
      %750 = vst [vmem:[%s289 + $0x70] sm:$0xff] %v557
      %751 = vst [vmem:[%s289 + $0x78] sm:$0xff] %v558
      %752 = vst [vmem:[%s295] sm:$0xff] %v720
      %753 = vst [vmem:[%s295 + $0x8] sm:$0xff] %v721
      %754 = vst [vmem:[%s295 + $0x10] sm:$0xff] %v722
      %755 = vst [vmem:[%s295 + $0x18] sm:$0xff] %v723
      %756 = vst [vmem:[%s295 + $0x20] sm:$0xff] %v724
      %757 = vst [vmem:[%s295 + $0x28] sm:$0xff] %v725
      %758 = vst [vmem:[%s295 + $0x30] sm:$0xff] %v726
      %759 = vst [vmem:[%s295 + $0x38] sm:$0xff] %v727
      %760 = vst [vmem:[%s295 + $0x40] sm:$0xff] %v728
      %761 = vst [vmem:[%s295 + $0x48] sm:$0xff] %v729
      %762 = vst [vmem:[%s295 + $0x50] sm:$0xff] %v730
      %763 = vst [vmem:[%s295 + $0x58] sm:$0xff] %v731
      %764 = vst [vmem:[%s295 + $0x60] sm:$0xff] %v732
      %765 = vst [vmem:[%s295 + $0x68] sm:$0xff] %v733
      %766 = vst [vmem:[%s295 + $0x70] sm:$0xff] %v734
      %767 = vst [vmem:[%s295 + $0x78] sm:$0xff] %v735
      %v768 = vsub.f32 %v543, %v720
      %v769 = vsub.f32 %v544, %v721
      %v770 = vsub.f32 %v545, %v722
      %v771 = vsub.f32 %v546, %v723
      %v772 = vsub.f32 %v547, %v724
      %v773 = vsub.f32 %v548, %v725
      %v774 = vsub.f32 %v549, %v726
      %v775 = vsub.f32 %v550, %v727
      %v776 = vsub.f32 %v551, %v728
      %v777 = vsub.f32 %v552, %v729
      %v778 = vsub.f32 %v553, %v730
      %v779 = vsub.f32 %v554, %v731
      %v780 = vsub.f32 %v555, %v732
      %v781 = vsub.f32 %v556, %v733
      %v782 = vsub.f32 %v557, %v734
      %v783 = vsub.f32 %v558, %v735
      %v784 = vand.u32 2147483647, %v768
      %v785 = vand.u32 2147483647, %v769
      %v786 = vand.u32 2147483647, %v770
      %v787 = vand.u32 2147483647, %v771
      %v788 = vand.u32 2147483647, %v772
      %v789 = vand.u32 2147483647, %v773
      %v790 = vand.u32 2147483647, %v774
      %v791 = vand.u32 2147483647, %v775
      %v792 = vand.u32 2147483647, %v776
      %v793 = vand.u32 2147483647, %v777
      %v794 = vand.u32 2147483647, %v778
      %v795 = vand.u32 2147483647, %v779
      %v796 = vand.u32 2147483647, %v780
      %v797 = vand.u32 2147483647, %v781
      %v798 = vand.u32 2147483647, %v782
      %v799 = vand.u32 2147483647, %v783
      %v800 = vadd.f32 %v784, %v785
      %v801 = vadd.f32 %v800, %v786
      %v802 = vadd.f32 %v801, %v787
      %v803 = vadd.f32 %v802, %v788
      %v804 = vadd.f32 %v803, %v789
      %v805 = vadd.f32 %v804, %v790
      %v806 = vadd.f32 %v805, %v791
      %v807 = vadd.f32 %v806, %v792
      %v808 = vadd.f32 %v807, %v793
      %v809 = vadd.f32 %v808, %v794
      %v810 = vadd.f32 %v809, %v795
      %v811 = vadd.f32 %v810, %v796
      %v812 = vadd.f32 %v811, %v797
      %v813 = vadd.f32 %v812, %v798
      %v814 = vadd.f32 %v813, %v799
      %v815 = vrot.slane %v814, 4
      %v816 = vadd.f32 %v814, %v815
      %v817 = vrot.slane %v816, 2
      %v818 = vadd.f32 %v816, %v817
      %v819 = vrot.slane %v818, 1
      %v820 = vadd.f32 %v818, %v819
      %v821 = vlaneseq
      %v822 = vshrl.u32 %v821, 7
      %vm823 = vcmp.eq.s32.totalorder %v822, 0
      %v824 = vsel %vm823, %v820, 0.0
      %825 = vst [vmem:[%s300] sm:$0xff] %v824
      %s826 = smul.u32 16, %s18
      %p827 = scmp.lt.s32.totalorder %s826, 63
      %s828 = scalar_select %p827, %s826, 63
      %s829 = smul.addr %s828, 8
      %s830 = scalar_lea.vmem %s4, %s829
      %s831 = smul.u32 16, %s18
      %p832 = scmp.lt.s32.totalorder %s831, 63
      %s833 = scalar_select %p832, %s831, 63
      %s834 = smul.addr %s833, 8
      %s835 = scalar_lea.vmem %s5, %s834
      %p836 = scmp.lt.s32.totalorder %s18, 3
      %s837 = scalar_select %p836, %s18, 3
      %s838 = smul.addr %s837, 8
      %s839 = scalar_lea.vmem %s6, %s838
      // Predicated region
      $region37: #{perceptual_loss.4} parent=35 // pred_check
        %p840 = pneg %p130
      $region38: #{perceptual_loss.4} parent=35 // pred_check_branch
        %842 = sbr.rel (%p840) target = $region40
      $region39: #{perceptual_loss.4} parent=35 // pred_region
        %s843 = smul.u32 16, %s18
      $region40: #{perceptual_loss.4} parent=35 // pred_fallthru
        _
      // Predicated region
      $region41: #{perceptual_loss.4} parent=35 // pred_check
        %p844 = pneg %p156
      $region42: #{perceptual_loss.4} parent=35 // pred_check_branch
        %846 = sbr.rel (%p844) target = $region44
      $region43: #{perceptual_loss.4} parent=35 // pred_region
        %s847 = smul.u32 16, %s18
      $region44: #{perceptual_loss.4} parent=35 // pred_fallthru
        _
      // Predicated region
      $region45: #{perceptual_loss.4} parent=35 // pred_check
        %p848 = pneg %p182
      $region46: #{perceptual_loss.4} parent=35 // pred_check_branch
        %850 = sbr.rel (%p848) target = $region48
      $region47: #{perceptual_loss.4} parent=35 // pred_region
        _
      $region48: #{perceptual_loss.4} parent=35 // pred_fallthru
        _
    $region36: #{perceptual_loss.4} parent=5 // pred_fallthru
      _
    %p851 = scmp.le.s32.totalorder 2, %s13
    // Predicated region
    $region49: #{perceptual_loss.4} parent=5 // pred_check
      %p852 = pneg %p851
    $region50: #{perceptual_loss.4} parent=5 // pred_check_branch
      %854 = sbr.rel (%p852) target = $region52
    $region51: #{perceptual_loss.4} parent=5 // pred_region
      %s855 = ssub.s32 %s13, 2
      // Predicated region
      $region53: #{perceptual_loss.4} parent=51 // pred_check
        %p856 = pneg %p136
      $region54: #{perceptual_loss.4} parent=51 // pred_check_branch
        %858 = sbr.rel (%p856) target = $region56
      $region55: #{perceptual_loss.4} parent=51 // pred_region
        %s859 = smul.u32 16, %s19
        %p860 = scmp.lt.s32.totalorder %s859, 63
        %s861 = scalar_select %p860, %s859, 63
        %s862 = smul.addr %s861, 8
        %s863 = scalar_lea.vmem %s4, %s862
      $region56: #{perceptual_loss.4} parent=51 // pred_fallthru
        _
      // Predicated region
      $region57: #{perceptual_loss.4} parent=51 // pred_check
        %p864 = pneg %p162
      $region58: #{perceptual_loss.4} parent=51 // pred_check_branch
        %866 = sbr.rel (%p864) target = $region60
      $region59: #{perceptual_loss.4} parent=51 // pred_region
        %s867 = smul.u32 16, %s19
        %p868 = scmp.lt.s32.totalorder %s867, 63
        %s869 = scalar_select %p868, %s867, 63
        %s870 = smul.addr %s869, 8
        %s871 = scalar_lea.vmem %s5, %s870
      $region60: #{perceptual_loss.4} parent=51 // pred_fallthru
        _
      // Predicated region
      $region61: #{perceptual_loss.4} parent=51 // pred_check
        %p872 = pneg %p188
      $region62: #{perceptual_loss.4} parent=51 // pred_check_branch
        %874 = sbr.rel (%p872) target = $region64
      $region63: #{perceptual_loss.4} parent=51 // pred_region
        %p875 = scmp.lt.s32.totalorder %s19, 3
        %s876 = scalar_select %p875, %s19, 3
        %s877 = smul.addr %s876, 8
        %s878 = scalar_lea.vmem %s6, %s877
      $region64: #{perceptual_loss.4} parent=51 // pred_fallthru
        _
    $region52: #{perceptual_loss.4} parent=5 // pred_fallthru
      _
  $region6: #{perceptual_loss.4} parent=0 // loop_footer
    %s17 = sadd.s32 1, %s13
  $region7: #{perceptual_loss.4} parent=0 // loop_footer_branch
    %12 = sbr.rel target = $region3
  $region8: #{perceptual_loss.4} parent=0 // loop_exit
    _

// kernel: perceptual_loss.5
$region0: #{perceptual_loss.5}
  #allocation0 [shape = 'u32[]', space=smem, size = 0x4, offset = 0x4, fixed_abs, tag = 'smem constant byte address 0x4 - core index']
  #allocation1 [shape = 'u32[144,128]{1,0:T(1,128)}', space=vmem, size = 0x12000, scoped, tag = 'internal scratch']
  %s0 = inlined_call_operand.vmem [shape: bf16[512,144], index: 0, kind: input, shape index: {}]
  %s1 = inlined_call_operand.vmem [shape: bf16[512,144], index: 1, kind: input, shape index: {}]
  %s2 = inlined_call_operand.vmem [shape: bf16[144,128], index: 2, kind: input, shape index: {}]
  %s3 = inlined_call_operand.vmem [shape: f32[1,128], index: 3, kind: input, shape index: {}]
  %s4 = inlined_call_operand.hbm [shape: f32[512,128], index: 4, kind: output, shape index: {0}]
  %s5 = inlined_call_operand.hbm [shape: f32[512,128], index: 5, kind: output, shape index: {1}]
  %s6 = inlined_call_operand.vmem [shape: f32[32,128], index: 6, kind: output, shape index: {2}]
  %7 = xla_tuple %s4, %s5, %s6
  %s8 = sld [smem:[#allocation0]]
  $region65: #{perceptual_loss.5} parent=0
    _
  %s10 = ssub.s32 1, %s8
  %s11 = scalar_select 0, %s10, %s8
  $region1: #{perceptual_loss.5} parent=0
    #allocation2 [shape = 'u8[131072]{0}', space=vmem, size = 0x20000, scoped, tag = 'output window, operand 0']
    #allocation3 [shape = 's32[2]{0}', space=sflag, size = 0x8, scoped, tag = 'scoped memory for perceptual_loss.5']
    #allocation4 [shape = 'u8[131072]{0}', space=vmem, size = 0x20000, scoped, tag = 'output window, operand 1']
    #allocation5 [shape = 's32[2]{0}', space=sflag, size = 0x8, scoped, tag = 'scoped memory for perceptual_loss.5']
    %12 = vsyncpa [#allocation3], 0
    %s13 = scalar_lea.sflag [#allocation3], 1
    %14 = vsyncpa %s13, 0
    %15 = vsyncpa [#allocation5], 0
    %s16 = scalar_lea.sflag [#allocation5], 1
    %17 = vsyncpa %s16, 0
    loop: start=0, step=1, limit=6
    $region2: #{perceptual_loss.5} parent=1 // loop_pre_header
      _
    $region3: #{perceptual_loss.5} parent=1 // loop_header
      %s19 = sphi 0, %s23
      %p20 = scmp.ge.s32.totalorder %s19, 6
      %s29 = sphi 0, %s31
      %s32 = sphi 0, %s29
      %s33 = sphi 0, %s32
      %s49 = sphi 0, %s33
      %s55 = sphi 0, %s57
      %s58 = sphi 0, %s55
      %s59 = sphi 0, %s58
      %s75 = sphi 0, %s59
      %s79 = sphi 0, %s79
      %s81 = sphi 0, %s79
      %s82 = sphi 0, %s81
      %s96 = sphi 0, %s82
      %s100 = sphi 0, %s100
      %s102 = sphi 0, %s100
      %s103 = sphi 0, %s102
      %s117 = sphi 0, %s103
      %s123 = sphi 0, %s125
      %s126 = sphi 0, %s123
      %s127 = sphi 0, %s126
      %s143 = sphi 0, %s127
      %s149 = sphi 0, %s151
      %s152 = sphi 0, %s149
      %s153 = sphi 0, %s152
      %s169 = sphi 0, %s153
      %s175 = sphi 0, %s177
      %s178 = sphi 0, %s175
      %s179 = sphi 0, %s178
      %s195 = sphi 0, %s179
    $region4: #{perceptual_loss.5} parent=1 // loop_header_branch
      %22 = sbr.rel (%p20) target = $region8
    $region5: #{perceptual_loss.5} parent=1 // loop_body
      %s24 = ssub.s32 %s19, 1
      %s25 = ssub.s32 %s19, 2
      %s26 = sadd.s32 %s19, 1
      %s27 = ssub.s32 %s19, %s26
      %p28 = scmp.eq.s32.totalorder %s27, 0
      %s30 = sadd.s32 %s29, 1
      %s31 = scalar_select %p28, %s29, %s30
      %p34 = pneg %p28
      %p35 = scmp.eq.s32.totalorder %s19, 3
      %p36 = por %p34, %p35
      %p37 = scmp.ne.s32.totalorder %s29, %s32
      %p38 = scmp.eq.s32.totalorder %s19, 0
      %p39 = por %p37, %p38
      %p40 = scmp.ne.s32.totalorder %s29, %s32
      %p41 = scmp.eq.s32.totalorder %s24, 3
      %p42 = por %p40, %p41
      %p43 = scmp.ne.s32.totalorder %s32, %s33
      %p44 = scmp.eq.s32.totalorder %s24, 0
      %p45 = por %p43, %p44
      %p46 = scmp.ne.s32.totalorder %s32, %s33
      %p47 = scmp.eq.s32.totalorder %s25, 3
      %p48 = por %p46, %p47
      %p50 = scmp.ne.s32.totalorder %s33, %s49
      %p51 = scmp.eq.s32.totalorder %s25, 0
      %p52 = por %p50, %p51
      %s53 = ssub.s32 %s19, %s26
      %p54 = scmp.eq.s32.totalorder %s53, 0
      %s56 = sadd.s32 %s55, 1
      %s57 = scalar_select %p54, %s55, %s56
      %p60 = pneg %p54
      %p61 = scmp.eq.s32.totalorder %s19, 3
      %p62 = por %p60, %p61
      %p63 = scmp.ne.s32.totalorder %s55, %s58
      %p64 = scmp.eq.s32.totalorder %s19, 0
      %p65 = por %p63, %p64
      %p66 = scmp.ne.s32.totalorder %s55, %s58
      %p67 = scmp.eq.s32.totalorder %s24, 3
      %p68 = por %p66, %p67
      %p69 = scmp.ne.s32.totalorder %s58, %s59
      %p70 = scmp.eq.s32.totalorder %s24, 0
      %p71 = por %p69, %p70
      %p72 = scmp.ne.s32.totalorder %s58, %s59
      %p73 = scmp.eq.s32.totalorder %s25, 3
      %p74 = por %p72, %p73
      %p76 = scmp.ne.s32.totalorder %s59, %s75
      %p77 = scmp.eq.s32.totalorder %s25, 0
      %p78 = por %p76, %p77
      %s80 = sadd.s32 %s79, 1
      %p83 = scmp.eq.s32.totalorder %s19, 3
      %p84 = scmp.ne.s32.totalorder %s79, %s81
      %p85 = scmp.eq.s32.totalorder %s19, 0
      %p86 = por %p84, %p85
      %p87 = scmp.ne.s32.totalorder %s79, %s81
      %p88 = scmp.eq.s32.totalorder %s24, 3
      %p89 = por %p87, %p88
      %p90 = scmp.ne.s32.totalorder %s81, %s82
      %p91 = scmp.eq.s32.totalorder %s24, 0
      %p92 = por %p90, %p91
      %p93 = scmp.ne.s32.totalorder %s81, %s82
      %p94 = scmp.eq.s32.totalorder %s25, 3
      %p95 = por %p93, %p94
      %p97 = scmp.ne.s32.totalorder %s82, %s96
      %p98 = scmp.eq.s32.totalorder %s25, 0
      %p99 = por %p97, %p98
      %s101 = sadd.s32 %s100, 1
      %p104 = scmp.eq.s32.totalorder %s19, 3
      %p105 = scmp.ne.s32.totalorder %s100, %s102
      %p106 = scmp.eq.s32.totalorder %s19, 0
      %p107 = por %p105, %p106
      %p108 = scmp.ne.s32.totalorder %s100, %s102
      %p109 = scmp.eq.s32.totalorder %s24, 3
      %p110 = por %p108, %p109
      %p111 = scmp.ne.s32.totalorder %s102, %s103
      %p112 = scmp.eq.s32.totalorder %s24, 0
      %p113 = por %p111, %p112
      %p114 = scmp.ne.s32.totalorder %s102, %s103
      %p115 = scmp.eq.s32.totalorder %s25, 3
      %p116 = por %p114, %p115
      %p118 = scmp.ne.s32.totalorder %s103, %s117
      %p119 = scmp.eq.s32.totalorder %s25, 0
      %p120 = por %p118, %p119
      %s121 = ssub.s32 %s19, %s26
      %p122 = scmp.eq.s32.totalorder %s121, 0
      %s124 = sadd.s32 %s123, 1
      %s125 = scalar_select %p122, %s123, %s124
      %p128 = pneg %p122
      %p129 = scmp.eq.s32.totalorder %s19, 3
      %p130 = por %p128, %p129
      %p131 = scmp.ne.s32.totalorder %s123, %s126
      %p132 = scmp.eq.s32.totalorder %s19, 0
      %p133 = por %p131, %p132
      %p134 = scmp.ne.s32.totalorder %s123, %s126
      %p135 = scmp.eq.s32.totalorder %s24, 3
      %p136 = por %p134, %p135
      %p137 = scmp.ne.s32.totalorder %s126, %s127
      %p138 = scmp.eq.s32.totalorder %s24, 0
      %p139 = por %p137, %p138
      %p140 = scmp.ne.s32.totalorder %s126, %s127
      %p141 = scmp.eq.s32.totalorder %s25, 3
      %p142 = por %p140, %p141
      %p144 = scmp.ne.s32.totalorder %s127, %s143
      %p145 = scmp.eq.s32.totalorder %s25, 0
      %p146 = por %p144, %p145
      %s147 = ssub.s32 %s19, %s26
      %p148 = scmp.eq.s32.totalorder %s147, 0
      %s150 = sadd.s32 %s149, 1
      %s151 = scalar_select %p148, %s149, %s150
      %p154 = pneg %p148
      %p155 = scmp.eq.s32.totalorder %s19, 3
      %p156 = por %p154, %p155
      %p157 = scmp.ne.s32.totalorder %s149, %s152
      %p158 = scmp.eq.s32.totalorder %s19, 0
      %p159 = por %p157, %p158
      %p160 = scmp.ne.s32.totalorder %s149, %s152
      %p161 = scmp.eq.s32.totalorder %s24, 3
      %p162 = por %p160, %p161
      %p163 = scmp.ne.s32.totalorder %s152, %s153
      %p164 = scmp.eq.s32.totalorder %s24, 0
      %p165 = por %p163, %p164
      %p166 = scmp.ne.s32.totalorder %s152, %s153
      %p167 = scmp.eq.s32.totalorder %s25, 3
      %p168 = por %p166, %p167
      %p170 = scmp.ne.s32.totalorder %s153, %s169
      %p171 = scmp.eq.s32.totalorder %s25, 0
      %p172 = por %p170, %p171
      %s173 = ssub.s32 %s19, %s26
      %p174 = scmp.eq.s32.totalorder %s173, 0
      %s176 = sadd.s32 %s175, 1
      %s177 = scalar_select %p174, %s175, %s176
      %p180 = pneg %p174
      %p181 = scmp.eq.s32.totalorder %s19, 3
      %p182 = por %p180, %p181
      %p183 = scmp.ne.s32.totalorder %s175, %s178
      %p184 = scmp.eq.s32.totalorder %s19, 0
      %p185 = por %p183, %p184
      %p186 = scmp.ne.s32.totalorder %s175, %s178
      %p187 = scmp.eq.s32.totalorder %s24, 3
      %p188 = por %p186, %p187
      %p189 = scmp.ne.s32.totalorder %s178, %s179
      %p190 = scmp.eq.s32.totalorder %s24, 0
      %p191 = por %p189, %p190
      %p192 = scmp.ne.s32.totalorder %s178, %s179
      %p193 = scmp.eq.s32.totalorder %s25, 3
      %p194 = por %p192, %p193
      %p196 = scmp.ne.s32.totalorder %s179, %s195
      %p197 = scmp.eq.s32.totalorder %s25, 0
      %p198 = por %p196, %p197
      %p199 = scmp.le.s32.totalorder 1, %s19
      %p200 = scmp.lt.s32.totalorder %s19, 5
      %p201 = pnand %p199, %p200
      %p202 = pneg %p201
      // Predicated region
      $region9: #{perceptual_loss.5} parent=5 // pred_check
        _
      $region10: #{perceptual_loss.5} parent=5 // pred_check_branch
        %204 = sbr.rel (%p201) target = $region12
      $region11: #{perceptual_loss.5} parent=5 // pred_region
        %s205 = ssub.s32 %s19, 1
        // Predicated region
        $region13: #{perceptual_loss.5} parent=11 // pred_check
          %p206 = pneg %p92
        $region14: #{perceptual_loss.5} parent=11 // pred_check_branch
          %208 = sbr.rel (%p206) target = $region16
        $region15: #{perceptual_loss.5} parent=11 // pred_region
          _
        $region16: #{perceptual_loss.5} parent=11 // pred_fallthru
          _
        // Predicated region
        $region17: #{perceptual_loss.5} parent=11 // pred_check
          %p209 = pneg %p113
        $region18: #{perceptual_loss.5} parent=11 // pred_check_branch
          %211 = sbr.rel (%p209) target = $region20
        $region19: #{perceptual_loss.5} parent=11 // pred_region
          _
        $region20: #{perceptual_loss.5} parent=11 // pred_fallthru
          _
      $region12: #{perceptual_loss.5} parent=5 // pred_fallthru
        _
      %p212 = scmp.lt.s32.totalorder %s19, 4
      // Predicated region
      $region21: #{perceptual_loss.5} parent=5 // pred_check
        %p213 = pneg %p212
      $region22: #{perceptual_loss.5} parent=5 // pred_check_branch
        %215 = sbr.rel (%p213) target = $region24
      $region23: #{perceptual_loss.5} parent=5 // pred_region
        // Predicated region
        $region25: #{perceptual_loss.5} parent=23 // pred_check
          %p216 = pneg %p39
        $region26: #{perceptual_loss.5} parent=23 // pred_check_branch
          %218 = sbr.rel (%p216) target = $region28
        $region27: #{perceptual_loss.5} parent=23 // pred_region
          %s219 = smul.u32 16, %s19
          %p220 = scmp.lt.s32.totalorder %s219, 63
          %s221 = scalar_select %p220, %s219, 63
          %s222 = smul.addr %s221, 2
          %s223 = smul.addr %s222, 4
          %s224 = scalar_lea.vmem %s0, %s223
          %s225 = smul.u32 16, %s19
        $region28: #{perceptual_loss.5} parent=23 // pred_fallthru
          _
        // Predicated region
        $region29: #{perceptual_loss.5} parent=23 // pred_check
          %p226 = pneg %p65
        $region30: #{perceptual_loss.5} parent=23 // pred_check_branch
          %228 = sbr.rel (%p226) target = $region32
        $region31: #{perceptual_loss.5} parent=23 // pred_region
          %s229 = smul.u32 16, %s19
          %p230 = scmp.lt.s32.totalorder %s229, 63
          %s231 = scalar_select %p230, %s229, 63
          %s232 = smul.addr %s231, 2
          %s233 = smul.addr %s232, 4
          %s234 = scalar_lea.vmem %s1, %s233
          %s235 = smul.u32 16, %s19
        $region32: #{perceptual_loss.5} parent=23 // pred_fallthru
          _
      $region24: #{perceptual_loss.5} parent=5 // pred_fallthru
        _
      %p236 = scmp.le.s32.totalorder 1, %s19
      %p237 = scmp.lt.s32.totalorder %s19, 5
      %p238 = pnand %p236, %p237
      %p239 = pneg %p238
      // Predicated region
      $region33: #{perceptual_loss.5} parent=5 // pred_check
        _
      $region34: #{perceptual_loss.5} parent=5 // pred_check_branch
        %241 = sbr.rel (%p238) target = $region36
      $region35: #{perceptual_loss.5} parent=5 // pred_region
        %s242 = ssub.s32 %s19, 1
        %s243 = smul.u32 16, %s24
        %p244 = scmp.lt.s32.totalorder %s243, 63
        %s245 = scalar_select %p244, %s243, 63
        %s246 = smul.addr %s245, 2
        %s247 = smul.addr %s246, 4
        %s248 = scalar_lea.vmem %s0, %s247
        %p249 = pneg %p45
        %p250 = pneg %p42
        %s251 = smul.u32 16, %s24
        %p252 = scmp.lt.s32.totalorder %s251, 63
        %s253 = scalar_select %p252, %s251, 63
        %s254 = smul.addr %s253, 2
        %s255 = smul.addr %s254, 4
        %s256 = scalar_lea.vmem %s1, %s255
        %p257 = pneg %p71
        %p258 = pneg %p68
        %p259 = pneg %p92
        %p260 = pneg %p89
        %p261 = pneg %p113
        %p262 = pneg %p110
        %p263 = pneg %p139
        %p264 = pneg %p136
        %s265 = sand.u32 %s126, 1
        %s266 = scalar_lea.sflag [#allocation3], %s265
        %s267 = sand.u32 %s126, 1
        %s268 = smul.addr %s267, 128
        %s269 = scalar_lea.vmem [#allocation2], %s268
        %p270 = pneg %p165
        %p271 = pneg %p162
        %s272 = sand.u32 %s152, 1
        %s273 = scalar_lea.sflag [#allocation5], %s272
        %s274 = sand.u32 %s152, 1
        %s275 = smul.addr %s274, 128
        %s276 = scalar_lea.vmem [#allocation4], %s275
        %p277 = pneg %p191
        %p278 = pneg %p188
        %p279 = scmp.lt.s32.totalorder %s24, 3
        %s280 = scalar_select %p279, %s24, 3
        %s281 = smul.addr %s280, 8
        %s282 = scalar_lea.vmem %s6, %s281
        %s283 = smul.u32 16, %s24
        %p284 = scmp.lt.s32.totalorder %s283, 63
        %s285 = scalar_select %p284, %s283, 63
        %s286 = smul.addr %s285, 2
        %s287 = smul.addr %s286, 4
        %s288 = scalar_lea.vmem %s0, %s287
        %s289 = smul.u32 16, %s24
        %s290 = smul.u32 16, %s24
        %p291 = scmp.lt.s32.totalorder %s290, 63
        %s292 = scalar_select %p291, %s290, 63
        %s293 = smul.addr %s292, 2
        %s294 = smul.addr %s293, 4
        %s295 = scalar_lea.vmem %s1, %s294
        %s296 = smul.u32 16, %s24
        %s297 = smul.u32 16, %s24
        %s298 = smul.u32 16, %s24
        %p299 = scmp.lt.s32.totalorder %s24, 3
        %s300 = scalar_select %p299, %s24, 3
        %s301 = smul.addr %s300, 8
        %s302 = scalar_lea.vmem %s6, %s301
        %v304 = vld [vmem:[%s288] sm:$0xff]
        %v305 = vld [vmem:[%s288 + $0x8] sm:$0xff]
        %v306 = vld [vmem:[%s288 + $0x10] sm:$0xff]
        %v307 = vld [vmem:[%s288 + $0x18] sm:$0xff]
        %v308 = vld [vmem:[%s288 + $0x20] sm:$0xff]
        %v309 = vld [vmem:[%s288 + $0x28] sm:$0xff]
        %v310 = vld [vmem:[%s288 + $0x30] sm:$0xff]
        %v311 = vld [vmem:[%s288 + $0x38] sm:$0xff]
        %v312 = vld [vmem:[%s288 + $0x40] sm:$0xff]
        %v313 = vld [vmem:[%s288 + $0x48] sm:$0xff]
        %v314 = vld [vmem:[%s288 + $0x50] sm:$0xff]
        %v315 = vld [vmem:[%s288 + $0x58] sm:$0xff]
        %v316 = vld [vmem:[%s288 + $0x60] sm:$0xff]
        %v317 = vld [vmem:[%s288 + $0x68] sm:$0xff]
        %v318 = vld [vmem:[%s288 + $0x70] sm:$0xff]
        %v319 = vld [vmem:[%s288 + $0x78] sm:$0xff]
        %v320 = vld [vmem:[%s2] sm:$0xf]
        %v321 = vld [vmem:[%s2 + $0x4] sm:$0xf]
        %v322 = vld [vmem:[%s2 + $0x8] sm:$0xf]
        %v323 = vld [vmem:[%s2 + $0xc] sm:$0xf]
        %v324 = vld [vmem:[%s2 + $0x10] sm:$0xf]
        %v325 = vld [vmem:[%s2 + $0x14] sm:$0xf]
        %v326 = vld [vmem:[%s2 + $0x18] sm:$0xf]
        %v327 = vld [vmem:[%s2 + $0x1c] sm:$0xf]
        %v328 = vld [vmem:[%s2 + $0x20] sm:$0xf]
        %v329 = vld [vmem:[%s2 + $0x24] sm:$0xf]
        %v330 = vld [vmem:[%s2 + $0x28] sm:$0xf]
        %v331 = vld [vmem:[%s2 + $0x2c] sm:$0xf]
        %v332 = vld [vmem:[%s2 + $0x30] sm:$0xf]
        %v333 = vld [vmem:[%s2 + $0x34] sm:$0xf]
        %v334 = vld [vmem:[%s2 + $0x38] sm:$0xf]
        %v335 = vld [vmem:[%s2 + $0x3c] sm:$0xf]
        %v336 = vld [vmem:[%s2 + $0x40] sm:$0xf]
        %v337 = vld [vmem:[%s2 + $0x44] sm:$0xf]
        %v338 = vld [vmem:[%s295] sm:$0xff]
        %v339 = vld [vmem:[%s295 + $0x8] sm:$0xff]
        %v340 = vld [vmem:[%s295 + $0x10] sm:$0xff]
        %v341 = vld [vmem:[%s295 + $0x18] sm:$0xff]
        %v342 = vld [vmem:[%s295 + $0x20] sm:$0xff]
        %v343 = vld [vmem:[%s295 + $0x28] sm:$0xff]
        %v344 = vld [vmem:[%s295 + $0x30] sm:$0xff]
        %v345 = vld [vmem:[%s295 + $0x38] sm:$0xff]
        %v346 = vld [vmem:[%s295 + $0x40] sm:$0xff]
        %v347 = vld [vmem:[%s295 + $0x48] sm:$0xff]
        %v348 = vld [vmem:[%s295 + $0x50] sm:$0xff]
        %v349 = vld [vmem:[%s295 + $0x58] sm:$0xff]
        %v350 = vld [vmem:[%s295 + $0x60] sm:$0xff]
        %v351 = vld [vmem:[%s295 + $0x68] sm:$0xff]
        %v352 = vld [vmem:[%s295 + $0x70] sm:$0xff]
        %v353 = vld [vmem:[%s295 + $0x78] sm:$0xff]
        %v354 = vld [vmem:[%s3] sm:$0x1]
        %v356 = vlaneseq
        %v357 = vshrl.u32 %v356, 7
        %v358 = vsub.s32 0, %v357
        %v359 = vrot.slane %v354, %v358
        %v377 = vunpack.c.l.b16 %v304
        %v378 = vunpack.c.h.b16 %v304
        %v379 = vunpack.c.l.b16 %v305
        %v380 = vunpack.c.h.b16 %v305
        %v381 = vunpack.c.l.b16 %v306
        %v382 = vunpack.c.h.b16 %v306
        %v383 = vunpack.c.l.b16 %v307
        %v384 = vunpack.c.h.b16 %v307
        %v385 = vunpack.c.l.b16 %v308
        %v386 = vunpack.c.h.b16 %v308
        %v387 = vunpack.c.l.b16 %v309
        %v388 = vunpack.c.h.b16 %v309
        %v389 = vunpack.c.l.b16 %v310
        %v390 = vunpack.c.h.b16 %v310
        %v391 = vunpack.c.l.b16 %v311
        %v392 = vunpack.c.h.b16 %v311
        %v393 = vunpack.c.l.b16 %v312
        %v394 = vunpack.c.h.b16 %v312
        %v395 = vunpack.c.l.b16 %v313
        %v396 = vunpack.c.h.b16 %v313
        %v397 = vunpack.c.l.b16 %v314
        %v398 = vunpack.c.h.b16 %v314
        %v399 = vunpack.c.l.b16 %v315
        %v400 = vunpack.c.h.b16 %v315
        %v401 = vunpack.c.l.b16 %v316
        %v402 = vunpack.c.h.b16 %v316
        %v403 = vunpack.c.l.b16 %v317
        %v404 = vunpack.c.h.b16 %v317
        %v405 = vunpack.c.l.b16 %v318
        %v406 = vunpack.c.h.b16 %v318
        %v407 = vunpack.c.l.b16 %v319
        %v408 = vunpack.c.h.b16 %v319
        %v409 = vpack.c.b16 %v379, %v377
        %v410 = vpack.c.b16 %v380, %v378
        %v411 = vpack.c.b16 %v383, %v381
        %v412 = vpack.c.b16 %v384, %v382
        %v413 = vpack.c.b16 %v387, %v385
        %v414 = vpack.c.b16 %v388, %v386
        %v415 = vpack.c.b16 %v391, %v389
        %v416 = vpack.c.b16 %v392, %v390
        %v417 = vpack.c.b16 %v395, %v393
        %v418 = vpack.c.b16 %v396, %v394
        %v419 = vpack.c.b16 %v399, %v397
        %v420 = vpack.c.b16 %v400, %v398
        %v421 = vpack.c.b16 %v403, %v401
        %v422 = vpack.c.b16 %v404, %v402
        %v423 = vpack.c.b16 %v407, %v405
        %v424 = vpack.c.b16 %v408, %v406
        %v451 = vunpack.c.l.b16 %v320
        %v452 = vunpack.c.l.b16 %v321
        %v453 = vunpack.c.l.b16 %v322
        %v454 = vunpack.c.l.b16 %v323
        %v455 = vunpack.c.l.b16 %v324
        %v456 = vunpack.c.l.b16 %v325
        %v457 = vunpack.c.l.b16 %v326
        %v458 = vunpack.c.l.b16 %v327
        %v459 = vunpack.c.l.b16 %v328
        %v460 = vunpack.c.l.b16 %v329
        %v461 = vunpack.c.l.b16 %v330
        %v462 = vunpack.c.l.b16 %v331
        %v463 = vunpack.c.l.b16 %v332
        %v464 = vunpack.c.l.b16 %v333
        %v465 = vunpack.c.l.b16 %v334
        %v466 = vunpack.c.l.b16 %v335
        %v467 = vunpack.c.l.b16 %v336
        %v468 = vunpack.c.l.b16 %v337
        %v469 = vpack.c.b16 %v452, %v451
        %v470 = vpack.c.b16 %v454, %v453
        %v471 = vpack.c.b16 %v456, %v455
        %v472 = vpack.c.b16 %v458, %v457
        %v473 = vpack.c.b16 %v460, %v459
        %v474 = vpack.c.b16 %v462, %v461
        %v475 = vpack.c.b16 %v464, %v463
        %v476 = vpack.c.b16 %v466, %v465
        %v477 = vpack.c.b16 %v468, %v467
        %vm487 = vcmask 130048
        %v489 = vsel %vm487, %v410, 0
        %v492 = vsel %vm487, %v412, 0
        %v495 = vsel %vm487, %v414, 0
        %v498 = vsel %vm487, %v416, 0
        %v501 = vsel %vm487, %v418, 0
        %v504 = vsel %vm487, %v420, 0
        %v507 = vsel %vm487, %v422, 0
        %v510 = vsel %vm487, %v424, 0
        %512 = vmatprep.subr.bf16.mxu0 0
        %513 = vmatpush1.bf16.msra.mxu0 %v469
        %514 = vmatprep.subr.bf16.mxu0 0
        %515 = vmatpush1.bf16.msra.mxu0 %v470
        %516 = vmatprep.subr.bf16.mxu0 0
        %517 = vmatpush1.bf16.msra.mxu0 %v471
        %518 = vmatprep.subr.bf16.mxu0 0
        %519 = vmatpush1.bf16.msra.mxu0 %v472
        %520 = vmatprep.subr.bf16.mxu0 0
        %521 = vmatpush1.bf16.msra.mxu0 %v473
        %522 = vmatprep.subr.bf16.mxu0 0
        %523 = vmatpush1.bf16.msra.mxu0 %v474
        %524 = vmatprep.subr.bf16.mxu0 0
        %525 = vmatpush1.bf16.msra.mxu0 %v475
        %526 = vmatprep.subr.bf16.mxu0 0
        %527 = vmatpush1.bf16.msra.mxu0 %v476
        %528 = vmatprep.subr.bf16.mxu0 0
        %529 = vmatpush1.bf16.msra.mxu0 %v477
        %530 = vmatprep.subr.bf16.mxu0 0
        %531 = vmatpush1.bf16.msra.mxu0 0
        %532 = vmatprep.subr.bf16.mxu0 0
        %533 = vmatpush1.bf16.msra.mxu0 0
        %534 = vmatprep.subr.bf16.mxu0 0
        %535 = vmatpush1.bf16.msra.mxu0 0
        %536 = vmatprep.subr.bf16.mxu0 0
        %537 = vmatpush1.bf16.msra.mxu0 0
        %538 = vmatprep.subr.bf16.mxu0 0
        %539 = vmatpush1.bf16.msra.mxu0 0
        %540 = vmatprep.subr.bf16.mxu0 0
        %541 = vmatpush1.bf16.msra.mxu0 0
        %542 = vmatprep.subr.bf16.mxu0 0
        %543 = vmatpush1.bf16.msra.mxu0 0
        %544 = vmatprep.mubr.bf16.mxu0 %v489
        %545 = vmatmul.mubr.bf16.gmra.mrb[0].mxu0 %v409
        %v546 = vpop.f32.mrb[0].mxu0
        %v547 = vadd.f32 %v359, %v546
        %v548 = vpop.f32.mrb[0].mxu0
        %v549 = vpop.f32.mrb[0].mxu0
        %v550 = vadd.f32 %v359, %v549
        %v551 = vpop.f32.mrb[0].mxu0
        %552 = vmatprep.mubr.bf16.mxu0 %v492
        %553 = vmatmul.mubr.bf16.gmra.mrb[0].mxu0 %v411
        %v554 = vpop.f32.mrb[0].mxu0
        %v555 = vadd.f32 %v359, %v554
        %v556 = vpop.f32.mrb[0].mxu0
        %v557 = vpop.f32.mrb[0].mxu0
        %v558 = vadd.f32 %v359, %v557
        %v559 = vpop.f32.mrb[0].mxu0
        %560 = vmatprep.mubr.bf16.mxu0 %v495
        %561 = vmatmul.mubr.bf16.gmra.mrb[0].mxu0 %v413
        %v562 = vpop.f32.mrb[0].mxu0
        %v563 = vadd.f32 %v359, %v562
        %v564 = vpop.f32.mrb[0].mxu0
        %v565 = vpop.f32.mrb[0].mxu0
        %v566 = vadd.f32 %v359, %v565
        %v567 = vpop.f32.mrb[0].mxu0
        %568 = vmatprep.mubr.bf16.mxu0 %v498
        %569 = vmatmul.mubr.bf16.gmra.mrb[0].mxu0 %v415
        %v570 = vpop.f32.mrb[0].mxu0
        %v571 = vadd.f32 %v359, %v570
        %v572 = vpop.f32.mrb[0].mxu0
        %v573 = vpop.f32.mrb[0].mxu0
        %v574 = vadd.f32 %v359, %v573
        %v575 = vpop.f32.mrb[0].mxu0
        %576 = vmatprep.mubr.bf16.mxu0 %v501
        %577 = vmatmul.mubr.bf16.gmra.mrb[0].mxu0 %v417
        %v578 = vpop.f32.mrb[0].mxu0
        %v579 = vadd.f32 %v359, %v578
        %v580 = vpop.f32.mrb[0].mxu0
        %v581 = vpop.f32.mrb[0].mxu0
        %v582 = vadd.f32 %v359, %v581
        %v583 = vpop.f32.mrb[0].mxu0
        %584 = vmatprep.mubr.bf16.mxu0 %v504
        %585 = vmatmul.mubr.bf16.gmra.mrb[0].mxu0 %v419
        %v586 = vpop.f32.mrb[0].mxu0
        %v587 = vadd.f32 %v359, %v586
        %v588 = vpop.f32.mrb[0].mxu0
        %v589 = vpop.f32.mrb[0].mxu0
        %v590 = vadd.f32 %v359, %v589
        %v591 = vpop.f32.mrb[0].mxu0
        %592 = vmatprep.mubr.bf16.mxu0 %v507
        %593 = vmatmul.mubr.bf16.gmra.mrb[0].mxu0 %v421
        %v594 = vpop.f32.mrb[0].mxu0
        %v595 = vadd.f32 %v359, %v594
        %v596 = vpop.f32.mrb[0].mxu0
        %v597 = vpop.f32.mrb[0].mxu0
        %v598 = vadd.f32 %v359, %v597
        %v599 = vpop.f32.mrb[0].mxu0
        %600 = vmatprep.mubr.bf16.mxu0 %v510
        %601 = vmatmul.mubr.bf16.gmra.mrb[0].mxu0 %v423
        %v602 = vpop.f32.mrb[0].mxu0
        %v603 = vadd.f32 %v359, %v602
        %v604 = vpop.f32.mrb[0].mxu0
        %v605 = vpop.f32.mrb[0].mxu0
        %v606 = vadd.f32 %v359, %v605
        %v607 = vpop.f32.mrb[0].mxu0
        %608 = vdwg.mxu0
        %v609 = vmax.f32 %v547, 0.0
        %v610 = vmax.f32 %v550, 0.0
        %v611 = vmax.f32 %v555, 0.0
        %v612 = vmax.f32 %v558, 0.0
        %v613 = vmax.f32 %v563, 0.0
        %v614 = vmax.f32 %v566, 0.0
        %v615 = vmax.f32 %v571, 0.0
        %v616 = vmax.f32 %v574, 0.0
        %v617 = vmax.f32 %v579, 0.0
        %v618 = vmax.f32 %v582, 0.0
        %v619 = vmax.f32 %v587, 0.0
        %v620 = vmax.f32 %v590, 0.0
        %v621 = vmax.f32 %v595, 0.0
        %v622 = vmax.f32 %v598, 0.0
        %v623 = vmax.f32 %v603, 0.0
        %v624 = vmax.f32 %v606, 0.0
        %v641 = vunpack.c.l.b16 %v338
        %v642 = vunpack.c.h.b16 %v338
        %v643 = vunpack.c.l.b16 %v339
        %v644 = vunpack.c.h.b16 %v339
        %v645 = vunpack.c.l.b16 %v340
        %v646 = vunpack.c.h.b16 %v340
        %v647 = vunpack.c.l.b16 %v341
        %v648 = vunpack.c.h.b16 %v341
        %v649 = vunpack.c.l.b16 %v342
        %v650 = vunpack.c.h.b16 %v342
        %v651 = vunpack.c.l.b16 %v343
        %v652 = vunpack.c.h.b16 %v343
        %v653 = vunpack.c.l.b16 %v344
        %v654 = vunpack.c.h.b16 %v344
        %v655 = vunpack.c.l.b16 %v345
        %v656 = vunpack.c.h.b16 %v345
        %v657 = vunpack.c.l.b16 %v346
        %v658 = vunpack.c.h.b16 %v346
        %v659 = vunpack.c.l.b16 %v347
        %v660 = vunpack.c.h.b16 %v347
        %v661 = vunpack.c.l.b16 %v348
        %v662 = vunpack.c.h.b16 %v348
        %v663 = vunpack.c.l.b16 %v349
        %v664 = vunpack.c.h.b16 %v349
        %v665 = vunpack.c.l.b16 %v350
        %v666 = vunpack.c.h.b16 %v350
        %v667 = vunpack.c.l.b16 %v351
        %v668 = vunpack.c.h.b16 %v351
        %v669 = vunpack.c.l.b16 %v352
        %v670 = vunpack.c.h.b16 %v352
        %v671 = vunpack.c.l.b16 %v353
        %v672 = vunpack.c.h.b16 %v353
        %v673 = vpack.c.b16 %v643, %v641
        %v674 = vpack.c.b16 %v644, %v642
        %v675 = vpack.c.b16 %v647, %v645
        %v676 = vpack.c.b16 %v648, %v646
        %v677 = vpack.c.b16 %v651, %v649
        %v678 = vpack.c.b16 %v652, %v650
        %v679 = vpack.c.b16 %v655, %v653
        %v680 = vpack.c.b16 %v656, %v654
        %v681 = vpack.c.b16 %v659, %v657
        %v682 = vpack.c.b16 %v660, %v658
        %v683 = vpack.c.b16 %v663, %v661
        %v684 = vpack.c.b16 %v664, %v662
        %v685 = vpack.c.b16 %v667, %v665
        %v686 = vpack.c.b16 %v668, %v666
        %v687 = vpack.c.b16 %v671, %v669
        %v688 = vpack.c.b16 %v672, %v670
        %v698 = vsel %vm487, %v674, 0
        %v701 = vsel %vm487, %v676, 0
        %v704 = vsel %vm487, %v678, 0
        %v707 = vsel %vm487, %v680, 0
        %v710 = vsel %vm487, %v682, 0
        %v713 = vsel %vm487, %v684, 0
        %v716 = vsel %vm487, %v686, 0
        %v719 = vsel %vm487, %v688, 0
        %721 = vmatprep.subr.bf16.mxu0 0
        %722 = vmatpush1.bf16.msra.mxu0 %v469
        %723 = vmatprep.subr.bf16.mxu0 0
        %724 = vmatpush1.bf16.msra.mxu0 %v470
        %725 = vmatprep.subr.bf16.mxu0 0
        %726 = vmatpush1.bf16.msra.mxu0 %v471
        %727 = vmatprep.subr.bf16.mxu0 0
        %728 = vmatpush1.bf16.msra.mxu0 %v472
        %729 = vmatprep.subr.bf16.mxu0 0
        %730 = vmatpush1.bf16.msra.mxu0 %v473
        %731 = vmatprep.subr.bf16.mxu0 0
        %732 = vmatpush1.bf16.msra.mxu0 %v474
        %733 = vmatprep.subr.bf16.mxu0 0
        %734 = vmatpush1.bf16.msra.mxu0 %v475
        %735 = vmatprep.subr.bf16.mxu0 0
        %736 = vmatpush1.bf16.msra.mxu0 %v476
        %737 = vmatprep.subr.bf16.mxu0 0
        %738 = vmatpush1.bf16.msra.mxu0 %v477
        %739 = vmatprep.subr.bf16.mxu0 0
        %740 = vmatpush1.bf16.msra.mxu0 0
        %741 = vmatprep.subr.bf16.mxu0 0
        %742 = vmatpush1.bf16.msra.mxu0 0
        %743 = vmatprep.subr.bf16.mxu0 0
        %744 = vmatpush1.bf16.msra.mxu0 0
        %745 = vmatprep.subr.bf16.mxu0 0
        %746 = vmatpush1.bf16.msra.mxu0 0
        %747 = vmatprep.subr.bf16.mxu0 0
        %748 = vmatpush1.bf16.msra.mxu0 0
        %749 = vmatprep.subr.bf16.mxu0 0
        %750 = vmatpush1.bf16.msra.mxu0 0
        %751 = vmatprep.subr.bf16.mxu0 0
        %752 = vmatpush1.bf16.msra.mxu0 0
        %753 = vmatprep.mubr.bf16.mxu0 %v698
        %754 = vmatmul.mubr.bf16.gmra.mrb[0].mxu0 %v673
        %v755 = vpop.f32.mrb[0].mxu0
        %v756 = vadd.f32 %v359, %v755
        %v757 = vpop.f32.mrb[0].mxu0
        %v758 = vpop.f32.mrb[0].mxu0
        %v759 = vadd.f32 %v359, %v758
        %v760 = vpop.f32.mrb[0].mxu0
        %761 = vmatprep.mubr.bf16.mxu0 %v701
        %762 = vmatmul.mubr.bf16.gmra.mrb[0].mxu0 %v675
        %v763 = vpop.f32.mrb[0].mxu0
        %v764 = vadd.f32 %v359, %v763
        %v765 = vpop.f32.mrb[0].mxu0
        %v766 = vpop.f32.mrb[0].mxu0
        %v767 = vadd.f32 %v359, %v766
        %v768 = vpop.f32.mrb[0].mxu0
        %769 = vmatprep.mubr.bf16.mxu0 %v704
        %770 = vmatmul.mubr.bf16.gmra.mrb[0].mxu0 %v677
        %v771 = vpop.f32.mrb[0].mxu0
        %v772 = vadd.f32 %v359, %v771
        %v773 = vpop.f32.mrb[0].mxu0
        %v774 = vpop.f32.mrb[0].mxu0
        %v775 = vadd.f32 %v359, %v774
        %v776 = vpop.f32.mrb[0].mxu0
        %777 = vmatprep.mubr.bf16.mxu0 %v707
        %778 = vmatmul.mubr.bf16.gmra.mrb[0].mxu0 %v679
        %v779 = vpop.f32.mrb[0].mxu0
        %v780 = vadd.f32 %v359, %v779
        %v781 = vpop.f32.mrb[0].mxu0
        %v782 = vpop.f32.mrb[0].mxu0
        %v783 = vadd.f32 %v359, %v782
        %v784 = vpop.f32.mrb[0].mxu0
        %785 = vmatprep.mubr.bf16.mxu0 %v710
        %786 = vmatmul.mubr.bf16.gmra.mrb[0].mxu0 %v681
        %v787 = vpop.f32.mrb[0].mxu0
        %v788 = vadd.f32 %v359, %v787
        %v789 = vpop.f32.mrb[0].mxu0
        %v790 = vpop.f32.mrb[0].mxu0
        %v791 = vadd.f32 %v359, %v790
        %v792 = vpop.f32.mrb[0].mxu0
        %793 = vmatprep.mubr.bf16.mxu0 %v713
        %794 = vmatmul.mubr.bf16.gmra.mrb[0].mxu0 %v683
        %v795 = vpop.f32.mrb[0].mxu0
        %v796 = vadd.f32 %v359, %v795
        %v797 = vpop.f32.mrb[0].mxu0
        %v798 = vpop.f32.mrb[0].mxu0
        %v799 = vadd.f32 %v359, %v798
        %v800 = vpop.f32.mrb[0].mxu0
        %801 = vmatprep.mubr.bf16.mxu0 %v716
        %802 = vmatmul.mubr.bf16.gmra.mrb[0].mxu0 %v685
        %v803 = vpop.f32.mrb[0].mxu0
        %v804 = vadd.f32 %v359, %v803
        %v805 = vpop.f32.mrb[0].mxu0
        %v806 = vpop.f32.mrb[0].mxu0
        %v807 = vadd.f32 %v359, %v806
        %v808 = vpop.f32.mrb[0].mxu0
        %809 = vmatprep.mubr.bf16.mxu0 %v719
        %810 = vmatmul.mubr.bf16.gmra.mrb[0].mxu0 %v687
        %v811 = vpop.f32.mrb[0].mxu0
        %v812 = vadd.f32 %v359, %v811
        %v813 = vpop.f32.mrb[0].mxu0
        %v814 = vpop.f32.mrb[0].mxu0
        %v815 = vadd.f32 %v359, %v814
        %v816 = vpop.f32.mrb[0].mxu0
        %817 = vdwg.mxu0
        %v818 = vmax.f32 %v756, 0.0
        %v819 = vmax.f32 %v759, 0.0
        %v820 = vmax.f32 %v764, 0.0
        %v821 = vmax.f32 %v767, 0.0
        %v822 = vmax.f32 %v772, 0.0
        %v823 = vmax.f32 %v775, 0.0
        %v824 = vmax.f32 %v780, 0.0
        %v825 = vmax.f32 %v783, 0.0
        %v826 = vmax.f32 %v788, 0.0
        %v827 = vmax.f32 %v791, 0.0
        %v828 = vmax.f32 %v796, 0.0
        %v829 = vmax.f32 %v799, 0.0
        %v830 = vmax.f32 %v804, 0.0
        %v831 = vmax.f32 %v807, 0.0
        %v832 = vmax.f32 %v812, 0.0
        %v833 = vmax.f32 %v815, 0.0
        %834 = vst [vmem:[%s269] sm:$0xff] %v609
        %835 = vst [vmem:[%s269 + $0x8] sm:$0xff] %v610
        %836 = vst [vmem:[%s269 + $0x10] sm:$0xff] %v611
        %837 = vst [vmem:[%s269 + $0x18] sm:$0xff] %v612
        %838 = vst [vmem:[%s269 + $0x20] sm:$0xff] %v613
        %839 = vst [vmem:[%s269 + $0x28] sm:$0xff] %v614
        %840 = vst [vmem:[%s269 + $0x30] sm:$0xff] %v615
        %841 = vst [vmem:[%s269 + $0x38] sm:$0xff] %v616
        %842 = vst [vmem:[%s269 + $0x40] sm:$0xff] %v617
        %843 = vst [vmem:[%s269 + $0x48] sm:$0xff] %v618
        %844 = vst [vmem:[%s269 + $0x50] sm:$0xff] %v619
        %845 = vst [vmem:[%s269 + $0x58] sm:$0xff] %v620
        %846 = vst [vmem:[%s269 + $0x60] sm:$0xff] %v621
        %847 = vst [vmem:[%s269 + $0x68] sm:$0xff] %v622
        %848 = vst [vmem:[%s269 + $0x70] sm:$0xff] %v623
        %849 = vst [vmem:[%s269 + $0x78] sm:$0xff] %v624
        %850 = vst [vmem:[%s276] sm:$0xff] %v818
        %851 = vst [vmem:[%s276 + $0x8] sm:$0xff] %v819
        %852 = vst [vmem:[%s276 + $0x10] sm:$0xff] %v820
        %853 = vst [vmem:[%s276 + $0x18] sm:$0xff] %v821
        %854 = vst [vmem:[%s276 + $0x20] sm:$0xff] %v822
        %855 = vst [vmem:[%s276 + $0x28] sm:$0xff] %v823
        %856 = vst [vmem:[%s276 + $0x30] sm:$0xff] %v824
        %857 = vst [vmem:[%s276 + $0x38] sm:$0xff] %v825
        %858 = vst [vmem:[%s276 + $0x40] sm:$0xff] %v826
        %859 = vst [vmem:[%s276 + $0x48] sm:$0xff] %v827
        %860 = vst [vmem:[%s276 + $0x50] sm:$0xff] %v828
        %861 = vst [vmem:[%s276 + $0x58] sm:$0xff] %v829
        %862 = vst [vmem:[%s276 + $0x60] sm:$0xff] %v830
        %863 = vst [vmem:[%s276 + $0x68] sm:$0xff] %v831
        %864 = vst [vmem:[%s276 + $0x70] sm:$0xff] %v832
        %865 = vst [vmem:[%s276 + $0x78] sm:$0xff] %v833
        %v866 = vsub.f32 %v609, %v818
        %v867 = vsub.f32 %v610, %v819
        %v868 = vsub.f32 %v611, %v820
        %v869 = vsub.f32 %v612, %v821
        %v870 = vsub.f32 %v613, %v822
        %v871 = vsub.f32 %v614, %v823
        %v872 = vsub.f32 %v615, %v824
        %v873 = vsub.f32 %v616, %v825
        %v874 = vsub.f32 %v617, %v826
        %v875 = vsub.f32 %v618, %v827
        %v876 = vsub.f32 %v619, %v828
        %v877 = vsub.f32 %v620, %v829
        %v878 = vsub.f32 %v621, %v830
        %v879 = vsub.f32 %v622, %v831
        %v880 = vsub.f32 %v623, %v832
        %v881 = vsub.f32 %v624, %v833
        %v882 = vand.u32 2147483647, %v866
        %v883 = vand.u32 2147483647, %v867
        %v884 = vand.u32 2147483647, %v868
        %v885 = vand.u32 2147483647, %v869
        %v886 = vand.u32 2147483647, %v870
        %v887 = vand.u32 2147483647, %v871
        %v888 = vand.u32 2147483647, %v872
        %v889 = vand.u32 2147483647, %v873
        %v890 = vand.u32 2147483647, %v874
        %v891 = vand.u32 2147483647, %v875
        %v892 = vand.u32 2147483647, %v876
        %v893 = vand.u32 2147483647, %v877
        %v894 = vand.u32 2147483647, %v878
        %v895 = vand.u32 2147483647, %v879
        %v896 = vand.u32 2147483647, %v880
        %v897 = vand.u32 2147483647, %v881
        %v898 = vadd.f32 %v882, %v883
        %v899 = vadd.f32 %v898, %v884
        %v900 = vadd.f32 %v899, %v885
        %v901 = vadd.f32 %v900, %v886
        %v902 = vadd.f32 %v901, %v887
        %v903 = vadd.f32 %v902, %v888
        %v904 = vadd.f32 %v903, %v889
        %v905 = vadd.f32 %v904, %v890
        %v906 = vadd.f32 %v905, %v891
        %v907 = vadd.f32 %v906, %v892
        %v908 = vadd.f32 %v907, %v893
        %v909 = vadd.f32 %v908, %v894
        %v910 = vadd.f32 %v909, %v895
        %v911 = vadd.f32 %v910, %v896
        %v912 = vadd.f32 %v911, %v897
        %v913 = vrot.slane %v912, 4
        %v914 = vadd.f32 %v912, %v913
        %v915 = vrot.slane %v914, 2
        %v916 = vadd.f32 %v914, %v915
        %v917 = vrot.slane %v916, 1
        %v918 = vadd.f32 %v916, %v917
        %v919 = vlaneseq
        %v920 = vshrl.u32 %v919, 7
        %vm921 = vcmp.eq.s32.totalorder %v920, 0
        %v922 = vsel %vm921, %v918, 0.0
        %923 = vst [vmem:[%s302] sm:$0xff] %v922
        %s924 = sand.u32 %s126, 1
        %s925 = scalar_lea.sflag [#allocation3], %s924
        %s926 = sand.u32 %s126, 1
        %s927 = smul.addr %s926, 128
        %s928 = scalar_lea.vmem [#allocation2], %s927
        %s929 = sand.u32 %s152, 1
        %s930 = scalar_lea.sflag [#allocation5], %s929
        %s931 = sand.u32 %s152, 1
        %s932 = smul.addr %s931, 128
        %s933 = scalar_lea.vmem [#allocation4], %s932
        %p934 = scmp.lt.s32.totalorder %s24, 3
        %s935 = scalar_select %p934, %s24, 3
        %s936 = smul.addr %s935, 8
        %s937 = scalar_lea.vmem %s6, %s936
        // Predicated region
        $region37: #{perceptual_loss.5} parent=35 // pred_check
          %p938 = pneg %p136
        $region38: #{perceptual_loss.5} parent=35 // pred_check_branch
          %940 = sbr.rel (%p938) target = $region40
        $region39: #{perceptual_loss.5} parent=35 // pred_region
          %s941 = smul.u32 16, %s24
          %s943 = ssub.s32 2048, 2048
          %944 = vsyncadd %s925, %s943
          %s945 = smul.addr %s941, 128
          %s946 = scalar_lea.hbm %s4, %s945
          %s947 = sshll.u32 %s928, 4
          %s948 = int_to_ptr.vmem [resolvable:$true] %s947
          %953 = dma.vmem_to_hbm [thread:$0]  %s948, 2048, %s946, %s925, 128, 128, 8
        $region40: #{perceptual_loss.5} parent=35 // pred_fallthru
          _
        // Predicated region
        $region41: #{perceptual_loss.5} parent=35 // pred_check
          %p954 = pneg %p162
        $region42: #{perceptual_loss.5} parent=35 // pred_check_branch
          %956 = sbr.rel (%p954) target = $region44
        $region43: #{perceptual_loss.5} parent=35 // pred_region
          %s957 = smul.u32 16, %s24
          %s959 = ssub.s32 2048, 2048
          %960 = vsyncadd %s930, %s959
          %s961 = smul.addr %s957, 128
          %s962 = scalar_lea.hbm %s5, %s961
          %s963 = sshll.u32 %s933, 4
          %s964 = int_to_ptr.vmem [resolvable:$true] %s963
          %969 = dma.vmem_to_hbm [thread:$0]  %s964, 2048, %s962, %s930, 128, 128, 8
        $region44: #{perceptual_loss.5} parent=35 // pred_fallthru
          _
        // Predicated region
        $region45: #{perceptual_loss.5} parent=35 // pred_check
          %p970 = pneg %p188
        $region46: #{perceptual_loss.5} parent=35 // pred_check_branch
          %972 = sbr.rel (%p970) target = $region48
        $region47: #{perceptual_loss.5} parent=35 // pred_region
          _
        $region48: #{perceptual_loss.5} parent=35 // pred_fallthru
          _
      $region36: #{perceptual_loss.5} parent=5 // pred_fallthru
        _
      %p973 = scmp.le.s32.totalorder 2, %s19
      // Predicated region
      $region49: #{perceptual_loss.5} parent=5 // pred_check
        %p974 = pneg %p973
      $region50: #{perceptual_loss.5} parent=5 // pred_check_branch
        %976 = sbr.rel (%p974) target = $region52
      $region51: #{perceptual_loss.5} parent=5 // pred_region
        %s977 = ssub.s32 %s19, 2
        // Predicated region
        $region53: #{perceptual_loss.5} parent=51 // pred_check
          %p978 = pneg %p142
        $region54: #{perceptual_loss.5} parent=51 // pred_check_branch
          %980 = sbr.rel (%p978) target = $region56
        $region55: #{perceptual_loss.5} parent=51 // pred_region
          %s981 = sand.u32 %s127, 1
          %s982 = scalar_lea.sflag [#allocation3], %s981
          %s983 = sand.u32 %s127, 1
          %s984 = smul.addr %s983, 128
          %s985 = scalar_lea.vmem [#allocation2], %s984
          %986 = dma.done %s982, 2048
        $region56: #{perceptual_loss.5} parent=51 // pred_fallthru
          _
        // Predicated region
        $region57: #{perceptual_loss.5} parent=51 // pred_check
          %p987 = pneg %p168
        $region58: #{perceptual_loss.5} parent=51 // pred_check_branch
          %989 = sbr.rel (%p987) target = $region60
        $region59: #{perceptual_loss.5} parent=51 // pred_region
          %s990 = sand.u32 %s153, 1
          %s991 = scalar_lea.sflag [#allocation5], %s990
          %s992 = sand.u32 %s153, 1
          %s993 = smul.addr %s992, 128
          %s994 = scalar_lea.vmem [#allocation4], %s993
          %995 = dma.done %s991, 2048
        $region60: #{perceptual_loss.5} parent=51 // pred_fallthru
          _
        // Predicated region
        $region61: #{perceptual_loss.5} parent=51 // pred_check
          %p996 = pneg %p194
        $region62: #{perceptual_loss.5} parent=51 // pred_check_branch
          %998 = sbr.rel (%p996) target = $region64
        $region63: #{perceptual_loss.5} parent=51 // pred_region
          %p999 = scmp.lt.s32.totalorder %s25, 3
          %s1000 = scalar_select %p999, %s25, 3
          %s1001 = smul.addr %s1000, 8
          %s1002 = scalar_lea.vmem %s6, %s1001
        $region64: #{perceptual_loss.5} parent=51 // pred_fallthru
          _
      $region52: #{perceptual_loss.5} parent=5 // pred_fallthru
        _
    $region6: #{perceptual_loss.5} parent=1 // loop_footer
      %s23 = sadd.s32 1, %s19
    $region7: #{perceptual_loss.5} parent=1 // loop_footer_branch
      %18 = sbr.rel target = $region3
    $region8: #{perceptual_loss.5} parent=1 // loop_exit
      _
    %1003 = vsyncpa [#allocation3], 1
    %s1004 = scalar_lea.sflag [#allocation3], 1
    %1005 = vsyncpa %s1004, 1
    %1006 = vsyncpa [#allocation5], 1
    %s1007 = scalar_lea.sflag [#allocation5], 1
    %1008 = vsyncpa %s1007, 1

</llo_original>
